<compile_context>
chip_gen: v7x
topology: tpu7x:2x2x1
jax: 0.10.0
libtpu: 0.0.40
codegen_flags: <defaults>
</compile_context>

<pallas_src>
import numpy as np
import jax
import jax.numpy as jnp
from jax.experimental import pallas as pl
from jax.experimental.pallas import tpu as pltpu

IN_H = IN_W = 28        # MNIST-style input implied by fc = Linear(3200, 10)
K = 5                   # conv kernel size
C1 = 20                 # conv1 out channels
C2 = 50                 # conv2 out channels
H1 = IN_H - K + 1       # 24  conv1 output spatial
P1 = H1 // 2            # 12  after 2x2 maxpool
H2 = P1 - K + 1         # 8   conv2 output spatial
FLAT = C2 * H2 * H2     # 3200

X1_W = K * IN_W         # 140  conv1 im2row width (kh*28 + w_in)
HALF1 = 256             # conv1 lanes per w-parity: 12*20 valid + 16 zero pad
Y1_W = 2 * HALF1        # 512  conv1 output lane width (w_parity*256 + pooled_w*20 + c)
X2_W = K * HALF1        # 1280 fused conv2 contraction (kh*256 + pooled_w*20 + ci)
Y2_W = H2 * C2          # 400  valid conv2 output lanes (w*50 + c)
Y2_PAD = 512            # padded conv2 output lane width (lane-dense stores)

B_TILE_MAX = 32         # images per grid step for large batches (conv2 M = 256)


def mymodel_kernel(x1_ref, a1_ref, b1_ref, a2_ref, b2_ref, out_ref):
    # x1_ref : (B*24, 140)  bf16 im2row rows, ordered (h_parity, image, pooled_h)
    # a1_ref : (140, 512)   bf16 banded conv1 weights (cols: w_parity*256 + j*20 + c)
    # b1_ref : (1, 512)     f32 conv1 bias tiled per lane (pad lanes zero)
    # a2_ref : (1280, 512)  bf16 fused conv2 weights (rows: kh*256 + j*20 + ci)
    # b2_ref : (1, 512)     f32 conv2 bias tiled per lane (pad lanes zero)
    # out_ref: (B, 8, 512)  f32 conv2 output, rows = h, lanes = w*50 + c (+112 pad)
    b_tile = out_ref.shape[0]
    half = b_tile * P1                                      # rows per h-parity

    # ---- conv1 + bias + relu: one bf16 MXU matmul, f32 accumulation ----
    y1 = jnp.dot(x1_ref[...], a1_ref[...],
                 preferred_element_type=jnp.float32)        # (2*B*12, 512)
    y1 = jnp.maximum(y1 + b1_ref[...], 0.0)

    # ---- 2x2 maxpool: both directions are single aligned slice-maxes ----
    hp = jnp.maximum(y1[:half, :], y1[half:, :])            # H-pool  (B*12, 512)
    u = jnp.maximum(hp[:, :HALF1], hp[:, HALF1:])           # W-pool  (B*12, 256)
    u = u.reshape(b_tile, P1, HALF1).astype(jnp.bfloat16)

    # ---- conv2 + bias + relu: ONE fused MXU matmul over all 5 kh taps ----
    # tap slices concatenated along lanes at 256-aligned offsets
    x2 = jnp.concatenate([u[:, kh:kh + H2, :] for kh in range(K)], axis=-1)
    y2 = jnp.dot(x2.reshape(b_tile * H2, X2_W), a2_ref[...],
                 preferred_element_type=jnp.float32)        # (B*8, 512)
    y2 = jnp.maximum(y2 + b2_ref[...], 0.0)

    # TODO(synk): nn.Dropout(p=0.4) is eval-mode identity here (no RNG mask).
    out_ref[...] = y2.reshape(b_tile, H2, Y2_PAD)


def prepare_params(w1_oihw, b1, w2_oihw, b2):
    """Build banded bf16 weight matrices ONCE on the host; reuse across forward calls."""
    w1 = np.asarray(w1_oihw, np.float32)    # (20, 1, 5, 5)
    w2 = np.asarray(w2_oihw, np.float32)    # (50, 20, 5, 5)
    b1 = np.asarray(b1, np.float32)
    b2 = np.asarray(b2, np.float32)

    # conv1: rows = kh*28 + w_in, cols = (w_out%2)*256 + (w_out//2)*20 + c
    a1 = np.zeros((X1_W, Y1_W), np.float32)
    b1t = np.zeros((1, Y1_W), np.float32)
    for w_out in range(H1):
        col0 = (w_out % 2) * HALF1 + (w_out // 2) * C1
        b1t[0, col0:col0 + C1] = b1
        for kh in range(K):
            for kw in range(K):
                a1[kh * IN_W + (w_out + kw), col0:col0 + C1] = w1[:, 0, kh, kw]

    # conv2 (fused over kh): rows = kh*256 + pooled_w*20 + ci, cols = w_out*50 + c_out
    a2 = np.zeros((X2_W, Y2_PAD), np.float32)
    b2t = np.zeros((1, Y2_PAD), np.float32)
    for w_out in range(H2):
        col0 = w_out * C2
        b2t[0, col0:col0 + C2] = b2
        for kh in range(K):
            for kw in range(K):
                row0 = kh * HALF1 + (w_out + kw) * C1
                a2[row0:row0 + C1, col0:col0 + C2] = w2[:, :, kh, kw].T

    return (jnp.asarray(a1, jnp.bfloat16), jnp.asarray(b1t, jnp.float32),
            jnp.asarray(a2, jnp.bfloat16), jnp.asarray(b2t, jnp.float32))


@jax.jit
def mymodel_forward(x_nchw, a1, b1t, a2, b2t):
    n = x_nchw.shape[0]
    # >= 2 grid steps for small batches (v7x has 2 TCs); 32 images/step otherwise.
    b_tile = B_TILE_MAX if n >= 2 * B_TILE_MAX else max(1, -(-n // 2))
    n_pad = -(-n // b_tile) * b_tile
    g = n_pad // b_tile

    x = x_nchw.astype(jnp.float32).reshape(n, IN_H, IN_W)
    if n_pad != n:
        x = jnp.concatenate(
            [x, jnp.zeros((n_pad - n, IN_H, IN_W), jnp.float32)], axis=0)

    # conv1 im2row in the wrapper (lanes kh*28 + w_in); rows of each batch tile
    # re-ordered to (h_parity, image, pooled_h) so the in-kernel H-pool is one
    # aligned slice-max.
    x1 = jnp.concatenate([x[:, kh:kh + H1, :] for kh in range(K)], axis=-1)
    x1 = x1.reshape(g, b_tile, P1, 2, X1_W)            # h_out = 2*pooled_h + parity
    x1 = jnp.transpose(x1, (0, 3, 1, 2, 4))            # (g, parity, image, pooled_h, 140)
    x1 = x1.reshape(n_pad * H1, X1_W).astype(jnp.bfloat16)

    out = pl.pallas_call(
        mymodel_kernel,
        out_shape=jax.ShapeDtypeStruct((n_pad, H2, Y2_PAD), jnp.float32),
        grid_spec=pltpu.PrefetchScalarGridSpec(
            num_scalar_prefetch=0,
            grid=(g,),
            in_specs=[
                pl.BlockSpec((b_tile * H1, X1_W), lambda i: (i, 0)),
                pl.BlockSpec((X1_W, Y1_W), lambda i: (0, 0)),
                pl.BlockSpec((1, Y1_W), lambda i: (0, 0)),
                pl.BlockSpec((X2_W, Y2_PAD), lambda i: (0, 0)),
                pl.BlockSpec((1, Y2_PAD), lambda i: (0, 0)),
            ],
            out_specs=pl.BlockSpec((b_tile, H2, Y2_PAD), lambda i: (i, 0, 0)),
        ),
        compiler_params=pltpu.CompilerParams(
            dimension_semantics=("parallel",),
            vmem_limit_bytes=32 * 1024 * 1024),
    )(x1, a1, b1t, a2, b2t)

    # kernel layout (h, w*50+c) -> torch NCHW flatten order (c, h, w)
    out = out[:n, :, :Y2_W].reshape(n, H2, H2, C2)
    return jnp.transpose(out, (0, 3, 1, 2)).reshape(n, FLAT)


def reference_forward(x_nchw, w1, b1, w2, b2):
    """Pure-JAX f32 reference matching the PyTorch forward (eval-mode dropout)."""
    y = jax.lax.conv_general_dilated(x_nchw, w1, (1, 1), "VALID",
                                     dimension_numbers=("NCHW", "OIHW", "NCHW"))
    y = jax.nn.relu(y + b1[None, :, None, None])
    y = jax.lax.reduce_window(y, -jnp.inf, jax.lax.max,
                              (1, 1, 2, 2), (1, 1, 2, 2), "VALID")
    y = jax.lax.conv_general_dilated(y, w2, (1, 1), "VALID",
                                     dimension_numbers=("NCHW", "OIHW", "NCHW"))
    y = jax.nn.relu(y + b2[None, :, None, None])
    return y.reshape(y.shape[0], -1)


if __name__ == "__main__":
    key = jax.random.PRNGKey(0)
    kx, k1, k2, k3, k4 = jax.random.split(key, 5)
    batch = 2

    # Deterministic synthetic parameters in PyTorch shapes (not a checkpoint load).
    x = jax.random.normal(kx, (batch, 1, IN_H, IN_W), jnp.float32)
    w1 = jax.random.normal(k1, (C1, 1, K, K), jnp.float32) * 0.1    # Conv2d(1, 20, 5)
    b1 = jax.random.normal(k2, (C1,), jnp.float32) * 0.1
    w2 = jax.random.normal(k3, (C2, C1, K, K), jnp.float32) * 0.05  # Conv2d(20, 50, 5)
    b2 = jax.random.normal(k4, (C2,), jnp.float32) * 0.1

    # Weight matrices built once; only the pallas_call (+ cheap im2row) runs per call.
    a1, b1t, a2, b2t = prepare_params(w1, b1, w2, b2)

    out = jax.block_until_ready(mymodel_forward(x, a1, b1t, a2, b2t))
    assert out.shape == (batch, FLAT), out.shape

    ref = reference_forward(x, w1, b1, w2, b2)
    # bf16 MXU operands (f32 accumulation) -> tolerance relaxed vs the old f32 kernel.
    np.testing.assert_allclose(np.asarray(out), np.asarray(ref), rtol=2e-2, atol=2e-2)
    print("KERNEL_OK")
</pallas_src>

<mosaic_0001>
module attributes {stable_mosaic.version = 11 : i64} {
  func.func @mymodel_kernel(%arg0: i32, %arg1: memref<24x140xbf16, #tpu.memory_space<vmem>>, %arg2: memref<140x512xbf16, #tpu.memory_space<vmem>>, %arg3: memref<1x512xf32, #tpu.memory_space<vmem>>, %arg4: memref<1280x512xbf16, #tpu.memory_space<vmem>>, %arg5: memref<1x512xf32, #tpu.memory_space<vmem>>, %arg6: memref<1x8x512xf32, #tpu.memory_space<vmem>>) attributes {dimension_semantics = [#tpu.dimension_semantics<parallel>], iteration_bounds = array<i64: 2>, scalar_prefetch = 0 : i64, scratch_operands = 0 : i64, tpu.core_type = #tpu.core_type<tc>, window_params = [{transform_indices = @transform_0, window_bounds = array<i64: 24, 140>}, {pipeline_mode = #tpu.pipeline_mode<synchronous>, transform_indices = @transform_1, window_bounds = array<i64: 140, 512>}, {pipeline_mode = #tpu.pipeline_mode<synchronous>, transform_indices = @transform_2, window_bounds = array<i64: 1, 512>}, {pipeline_mode = #tpu.pipeline_mode<synchronous>, transform_indices = @transform_3, window_bounds = array<i64: 1280, 512>}, {pipeline_mode = #tpu.pipeline_mode<synchronous>, transform_indices = @transform_4, window_bounds = array<i64: 1, 512>}, {transform_indices = @transform_5, window_bounds = array<i64: 1, 8, 512>}]} {
    %c0 = arith.constant 0 : index
    %c0_0 = arith.constant 0 : index
    %0 = vector.load %arg1[%c0, %c0_0] : memref<24x140xbf16, #tpu.memory_space<vmem>>, vector<24x140xbf16>
    %c0_1 = arith.constant 0 : index
    %c0_2 = arith.constant 0 : index
    %1 = vector.load %arg2[%c0_1, %c0_2] : memref<140x512xbf16, #tpu.memory_space<vmem>>, vector<140x512xbf16>
    %cst = arith.constant dense<0.000000e+00> : vector<24x512xf32>
    %2 = tpu.matmul %0, %1, %cst {dimension_numbers = #tpu.dot_dimension_numbers<[1], [0], [0], [1], [0, 0, 1, 1], [], []>} : vector<24x140xbf16>, vector<140x512xbf16>, vector<24x512xf32> -> vector<24x512xf32>
    %c0_3 = arith.constant 0 : index
    %c0_4 = arith.constant 0 : index
    %3 = vector.load %arg3[%c0_3, %c0_4] : memref<1x512xf32, #tpu.memory_space<vmem>>, vector<1x512xf32>
    %4 = vector.broadcast %3 : vector<1x512xf32> to vector<24x512xf32>
    %5 = arith.addf %2, %4 : vector<24x512xf32>
    %cst_5 = arith.constant 0.000000e+00 : f32
    %6 = vector.broadcast %cst_5 : f32 to vector<24x512xf32>
    %7 = arith.maximumf %5, %6 : vector<24x512xf32>
    %8 = vector.extract_strided_slice %7 {offsets = [0, 0], sizes = [12, 512], strides = [1, 1]} : vector<24x512xf32> to vector<12x512xf32>
    %9 = vector.extract_strided_slice %7 {offsets = [12, 0], sizes = [12, 512], strides = [1, 1]} : vector<24x512xf32> to vector<12x512xf32>
    %10 = arith.maximumf %8, %9 : vector<12x512xf32>
    %11 = vector.extract_strided_slice %10 {offsets = [0, 0], sizes = [12, 256], strides = [1, 1]} : vector<12x512xf32> to vector<12x256xf32>
    %12 = vector.extract_strided_slice %10 {offsets = [0, 256], sizes = [12, 256], strides = [1, 1]} : vector<12x512xf32> to vector<12x256xf32>
    %13 = arith.maximumf %11, %12 : vector<12x256xf32>
    %14 = vector.shape_cast %13 : vector<12x256xf32> to vector<1x12x256xf32>
    %15 = arith.truncf %14 : vector<1x12x256xf32> to vector<1x12x256xbf16>
    %16 = vector.extract_strided_slice %15 {offsets = [0, 0, 0], sizes = [1, 8, 256], strides = [1, 1, 1]} : vector<1x12x256xbf16> to vector<1x8x256xbf16>
    %17 = vector.extract_strided_slice %15 {offsets = [0, 1, 0], sizes = [1, 8, 256], strides = [1, 1, 1]} : vector<1x12x256xbf16> to vector<1x8x256xbf16>
    %18 = vector.extract_strided_slice %15 {offsets = [0, 2, 0], sizes = [1, 8, 256], strides = [1, 1, 1]} : vector<1x12x256xbf16> to vector<1x8x256xbf16>
    %19 = vector.extract_strided_slice %15 {offsets = [0, 3, 0], sizes = [1, 8, 256], strides = [1, 1, 1]} : vector<1x12x256xbf16> to vector<1x8x256xbf16>
    %20 = vector.extract_strided_slice %15 {offsets = [0, 4, 0], sizes = [1, 8, 256], strides = [1, 1, 1]} : vector<1x12x256xbf16> to vector<1x8x256xbf16>
    %21 = tpu.concatenate %16, %17, %18, %19, %20 in 2 : vector<1x8x256xbf16>, vector<1x8x256xbf16>, vector<1x8x256xbf16>, vector<1x8x256xbf16>, vector<1x8x256xbf16> -> vector<1x8x1280xbf16>
    %22 = vector.shape_cast %21 : vector<1x8x1280xbf16> to vector<8x1280xbf16>
    %c0_6 = arith.constant 0 : index
    %c0_7 = arith.constant 0 : index
    %23 = vector.load %arg4[%c0_6, %c0_7] : memref<1280x512xbf16, #tpu.memory_space<vmem>>, vector<1280x512xbf16>
    %cst_8 = arith.constant dense<0.000000e+00> : vector<8x512xf32>
    %24 = tpu.matmul %22, %23, %cst_8 {dimension_numbers = #tpu.dot_dimension_numbers<[1], [0], [0], [1], [0, 0, 1, 1], [], []>} : vector<8x1280xbf16>, vector<1280x512xbf16>, vector<8x512xf32> -> vector<8x512xf32>
    %c0_9 = arith.constant 0 : index
    %c0_10 = arith.constant 0 : index
    %25 = vector.load %arg5[%c0_9, %c0_10] : memref<1x512xf32, #tpu.memory_space<vmem>>, vector<1x512xf32>
    %26 = vector.broadcast %25 : vector<1x512xf32> to vector<8x512xf32>
    %27 = arith.addf %24, %26 : vector<8x512xf32>
    %cst_11 = arith.constant 0.000000e+00 : f32
    %28 = vector.broadcast %cst_11 : f32 to vector<8x512xf32>
    %29 = arith.maximumf %27, %28 : vector<8x512xf32>
    %30 = vector.shape_cast %29 : vector<8x512xf32> to vector<1x8x512xf32>
    %c0_12 = arith.constant 0 : index
    %c0_13 = arith.constant 0 : index
    %c0_14 = arith.constant 0 : index
    %31 = vector.load %arg6[%c0_12, %c0_13, %c0_14] : memref<1x8x512xf32, #tpu.memory_space<vmem>>, vector<1x8x512xf32>
    tpu.vector_store %arg6[%c0_12, %c0_13, %c0_14], %30 {strides = array<i32>} : memref<1x8x512xf32, #tpu.memory_space<vmem>>, vector<1x8x512xf32>,
    return
  }
  func.func @transform_0(%arg0: i32) -> (i32, i32) {
    %c0_i32 = arith.constant 0 : i32
    %c0_i32_0 = arith.constant 0 : i32
    return %arg0, %c0_i32 : i32, i32
  }
  func.func @transform_1(%arg0: i32) -> (i32, i32) {
    %c0_i32 = arith.constant 0 : i32
    %c0_i32_0 = arith.constant 0 : i32
    %c0_i32_1 = arith.constant 0 : i32
    return %c0_i32, %c0_i32_0 : i32, i32
  }
  func.func @transform_2(%arg0: i32) -> (i32, i32) {
    %c0_i32 = arith.constant 0 : i32
    %c0_i32_0 = arith.constant 0 : i32
    %c0_i32_1 = arith.constant 0 : i32
    return %c0_i32, %c0_i32_0 : i32, i32
  }
  func.func @transform_3(%arg0: i32) -> (i32, i32) {
    %c0_i32 = arith.constant 0 : i32
    %c0_i32_0 = arith.constant 0 : i32
    %c0_i32_1 = arith.constant 0 : i32
    return %c0_i32, %c0_i32_0 : i32, i32
  }
  func.func @transform_4(%arg0: i32) -> (i32, i32) {
    %c0_i32 = arith.constant 0 : i32
    %c0_i32_0 = arith.constant 0 : i32
    %c0_i32_1 = arith.constant 0 : i32
    return %c0_i32, %c0_i32_0 : i32, i32
  }
  func.func @transform_5(%arg0: i32) -> (i32, i32, i32) {
    %c0_i32 = arith.constant 0 : i32
    %c0_i32_0 = arith.constant 0 : i32
    %c0_i32_1 = arith.constant 0 : i32
    return %arg0, %c0_i32, %c0_i32_0 : i32, i32, i32
  }
}

</mosaic_0001>

<llo_original>
// kernel: mymodel_forward.1
$region0: #{mymodel_forward.1}
  #allocation0 [shape = 'u32[]', space=smem, size = 0x4, offset = 0x4, fixed_abs, tag = 'smem constant byte address 0x4 - core index']
  #allocation1 [shape = 'u32[144,128]{1,0:T(1,128)}', space=vmem, size = 0x12000, scoped, tag = 'internal scratch']
  %s0 = inlined_call_operand.vmem [shape: bf16[48,140], index: 0, kind: input, shape index: {}]
  %s1 = inlined_call_operand.hbm [shape: bf16[140,512], index: 1, kind: input, shape index: {}]
  %s2 = inlined_call_operand.hbm [shape: f32[1,512], index: 2, kind: input, shape index: {}]
  %s3 = inlined_call_operand.hbm [shape: bf16[1280,512], index: 3, kind: input, shape index: {}]
  %s4 = inlined_call_operand.hbm [shape: f32[1,512], index: 4, kind: input, shape index: {}]
  %s5 = inlined_call_operand.vmem [shape: f32[2,8,512], index: 5, kind: output, shape index: {}]
  %s6 = sld [smem:[#allocation0]]
  $region69: #{mymodel_forward.1} parent=0
    _
  %s8 = ssub.s32 1, %s6
  %s9 = scalar_select 0, %s8, %s6
  $region1: #{mymodel_forward.1} parent=0
    #allocation2 [shape = 'u8[147456]{0}', space=vmem, size = 0x24000, scoped, tag = 'input window, operand 1, single buffered']
    #allocation3 [shape = 's32[2]{0}', space=sflag, size = 0x8, scoped, tag = 'scoped memory for mymodel_forward.1']
    #allocation4 [shape = 'u8[2048]{0}', space=vmem, size = 0x800, scoped, tag = 'input window, operand 2, single buffered']
    #allocation5 [shape = 's32[1]{0}', space=sflag, size = 0x4, scoped, tag = 'scoped memory for mymodel_forward.1']
    #allocation6 [shape = 'u8[1310720]{0}', space=vmem, size = 0x140000, scoped, tag = 'input window, operand 3, single buffered']
    #allocation7 [shape = 'u8[2048]{0}', space=vmem, size = 0x800, scoped, tag = 'input window, operand 4, single buffered']
    #allocation8 [shape = 's32[1]{0}', space=sflag, size = 0x4, scoped, tag = 'scoped memory for mymodel_forward.1']
    %10 = vsyncpa [#allocation3], 0
    %11 = vsyncpa [#allocation5], 0
    %12 = vsyncpa [#allocation8], 0
    loop: start=0, step=1, limit=4
    $region2: #{mymodel_forward.1} parent=1 // loop_pre_header
      _
    $region3: #{mymodel_forward.1} parent=1 // loop_header
      %s14 = sphi 0, %s18
      %p15 = scmp.ge.s32.totalorder %s14, 4
      %s24 = sphi 0, %s26
      %s27 = sphi 0, %s24
      %s28 = sphi 0, %s27
      %s44 = sphi 0, %s28
      %s48 = sphi 0, %s48
      %s50 = sphi 0, %s48
      %s51 = sphi 0, %s50
      %s65 = sphi 0, %s51
      %s69 = sphi 0, %s69
      %s71 = sphi 0, %s69
      %s72 = sphi 0, %s71
      %s86 = sphi 0, %s72
      %s90 = sphi 0, %s90
      %s92 = sphi 0, %s90
      %s93 = sphi 0, %s92
      %s107 = sphi 0, %s93
      %s111 = sphi 0, %s111
      %s113 = sphi 0, %s111
      %s114 = sphi 0, %s113
      %s128 = sphi 0, %s114
      %s134 = sphi 0, %s136
      %s137 = sphi 0, %s134
      %s138 = sphi 0, %s137
      %s154 = sphi 0, %s138
    $region4: #{mymodel_forward.1} parent=1 // loop_header_branch
      %17 = sbr.rel (%p15) target = $region8
    $region5: #{mymodel_forward.1} parent=1 // loop_body
      %s19 = ssub.s32 %s14, 1
      %s20 = ssub.s32 %s14, 2
      %s21 = sadd.s32 %s14, 1
      %s22 = ssub.s32 %s14, %s21
      %p23 = scmp.eq.s32.totalorder %s22, 0
      %s25 = sadd.s32 %s24, 1
      %s26 = scalar_select %p23, %s24, %s25
      %p29 = pneg %p23
      %p30 = scmp.eq.s32.totalorder %s14, 1
      %p31 = por %p29, %p30
      %p32 = scmp.ne.s32.totalorder %s24, %s27
      %p33 = scmp.eq.s32.totalorder %s14, 0
      %p34 = por %p32, %p33
      %p35 = scmp.ne.s32.totalorder %s24, %s27
      %p36 = scmp.eq.s32.totalorder %s19, 1
      %p37 = por %p35, %p36
      %p38 = scmp.ne.s32.totalorder %s27, %s28
      %p39 = scmp.eq.s32.totalorder %s19, 0
      %p40 = por %p38, %p39
      %p41 = scmp.ne.s32.totalorder %s27, %s28
      %p42 = scmp.eq.s32.totalorder %s20, 1
      %p43 = por %p41, %p42
      %p45 = scmp.ne.s32.totalorder %s28, %s44
      %p46 = scmp.eq.s32.totalorder %s20, 0
      %p47 = por %p45, %p46
      %s49 = sadd.s32 %s48, 1
      %p52 = scmp.eq.s32.totalorder %s14, 1
      %p53 = scmp.ne.s32.totalorder %s48, %s50
      %p54 = scmp.eq.s32.totalorder %s14, 0
      %p55 = por %p53, %p54
      %p56 = scmp.ne.s32.totalorder %s48, %s50
      %p57 = scmp.eq.s32.totalorder %s19, 1
      %p58 = por %p56, %p57
      %p59 = scmp.ne.s32.totalorder %s50, %s51
      %p60 = scmp.eq.s32.totalorder %s19, 0
      %p61 = por %p59, %p60
      %p62 = scmp.ne.s32.totalorder %s50, %s51
      %p63 = scmp.eq.s32.totalorder %s20, 1
      %p64 = por %p62, %p63
      %p66 = scmp.ne.s32.totalorder %s51, %s65
      %p67 = scmp.eq.s32.totalorder %s20, 0
      %p68 = por %p66, %p67
      %s70 = sadd.s32 %s69, 1
      %p73 = scmp.eq.s32.totalorder %s14, 1
      %p74 = scmp.ne.s32.totalorder %s69, %s71
      %p75 = scmp.eq.s32.totalorder %s14, 0
      %p76 = por %p74, %p75
      %p77 = scmp.ne.s32.totalorder %s69, %s71
      %p78 = scmp.eq.s32.totalorder %s19, 1
      %p79 = por %p77, %p78
      %p80 = scmp.ne.s32.totalorder %s71, %s72
      %p81 = scmp.eq.s32.totalorder %s19, 0
      %p82 = por %p80, %p81
      %p83 = scmp.ne.s32.totalorder %s71, %s72
      %p84 = scmp.eq.s32.totalorder %s20, 1
      %p85 = por %p83, %p84
      %p87 = scmp.ne.s32.totalorder %s72, %s86
      %p88 = scmp.eq.s32.totalorder %s20, 0
      %p89 = por %p87, %p88
      %s91 = sadd.s32 %s90, 1
      %p94 = scmp.eq.s32.totalorder %s14, 1
      %p95 = scmp.ne.s32.totalorder %s90, %s92
      %p96 = scmp.eq.s32.totalorder %s14, 0
      %p97 = por %p95, %p96
      %p98 = scmp.ne.s32.totalorder %s90, %s92
      %p99 = scmp.eq.s32.totalorder %s19, 1
      %p100 = por %p98, %p99
      %p101 = scmp.ne.s32.totalorder %s92, %s93
      %p102 = scmp.eq.s32.totalorder %s19, 0
      %p103 = por %p101, %p102
      %p104 = scmp.ne.s32.totalorder %s92, %s93
      %p105 = scmp.eq.s32.totalorder %s20, 1
      %p106 = por %p104, %p105
      %p108 = scmp.ne.s32.totalorder %s93, %s107
      %p109 = scmp.eq.s32.totalorder %s20, 0
      %p110 = por %p108, %p109
      %s112 = sadd.s32 %s111, 1
      %p115 = scmp.eq.s32.totalorder %s14, 1
      %p116 = scmp.ne.s32.totalorder %s111, %s113
      %p117 = scmp.eq.s32.totalorder %s14, 0
      %p118 = por %p116, %p117
      %p119 = scmp.ne.s32.totalorder %s111, %s113
      %p120 = scmp.eq.s32.totalorder %s19, 1
      %p121 = por %p119, %p120
      %p122 = scmp.ne.s32.totalorder %s113, %s114
      %p123 = scmp.eq.s32.totalorder %s19, 0
      %p124 = por %p122, %p123
      %p125 = scmp.ne.s32.totalorder %s113, %s114
      %p126 = scmp.eq.s32.totalorder %s20, 1
      %p127 = por %p125, %p126
      %p129 = scmp.ne.s32.totalorder %s114, %s128
      %p130 = scmp.eq.s32.totalorder %s20, 0
      %p131 = por %p129, %p130
      %s132 = ssub.s32 %s14, %s21
      %p133 = scmp.eq.s32.totalorder %s132, 0
      %s135 = sadd.s32 %s134, 1
      %s136 = scalar_select %p133, %s134, %s135
      %p139 = pneg %p133
      %p140 = scmp.eq.s32.totalorder %s14, 1
      %p141 = por %p139, %p140
      %p142 = scmp.ne.s32.totalorder %s134, %s137
      %p143 = scmp.eq.s32.totalorder %s14, 0
      %p144 = por %p142, %p143
      %p145 = scmp.ne.s32.totalorder %s134, %s137
      %p146 = scmp.eq.s32.totalorder %s19, 1
      %p147 = por %p145, %p146
      %p148 = scmp.ne.s32.totalorder %s137, %s138
      %p149 = scmp.eq.s32.totalorder %s19, 0
      %p150 = por %p148, %p149
      %p151 = scmp.ne.s32.totalorder %s137, %s138
      %p152 = scmp.eq.s32.totalorder %s20, 1
      %p153 = por %p151, %p152
      %p155 = scmp.ne.s32.totalorder %s138, %s154
      %p156 = scmp.eq.s32.totalorder %s20, 0
      %p157 = por %p155, %p156
      %p158 = scmp.le.s32.totalorder 1, %s14
      %p159 = scmp.lt.s32.totalorder %s14, 3
      %p160 = pnand %p158, %p159
      %p161 = pneg %p160
      // Predicated region
      $region9: #{mymodel_forward.1} parent=5 // pred_check
        _
      $region10: #{mymodel_forward.1} parent=5 // pred_check_branch
        %163 = sbr.rel (%p160) target = $region12
      $region11: #{mymodel_forward.1} parent=5 // pred_region
        %s164 = ssub.s32 %s14, 1
        // Predicated region
        $region13: #{mymodel_forward.1} parent=11 // pred_check
          %p165 = pneg %p61
        $region14: #{mymodel_forward.1} parent=11 // pred_check_branch
          %167 = sbr.rel (%p165) target = $region16
        $region15: #{mymodel_forward.1} parent=11 // pred_region
          %s169 = ssub.s32 4608, 4608
          %170 = vsyncadd [#allocation3], %s169
          %s171 = sshll.u32 [#allocation2], 4
          %s172 = int_to_ptr.vmem [resolvable:$true] %s171
          %177 = dma.hbm_to_vmem [thread:$0]  %s1, 4608, %s172, [#allocation3], 256, 256, 16
        $region16: #{mymodel_forward.1} parent=11 // pred_fallthru
          _
        // Predicated region
        $region17: #{mymodel_forward.1} parent=11 // pred_check
          %p178 = pneg %p82
        $region18: #{mymodel_forward.1} parent=11 // pred_check_branch
          %180 = sbr.rel (%p178) target = $region20
        $region19: #{mymodel_forward.1} parent=11 // pred_region
          %s182 = ssub.s32 64, 64
          %183 = vsyncadd [#allocation5], %s182
          %s185 = sshll.u32 [#allocation4], 4
          %s186 = int_to_ptr.vmem [resolvable:$true] %s185
          %188 = dma.hbm_to_vmem [thread:$0]  %s2, 64, %s186, [#allocation5]
        $region20: #{mymodel_forward.1} parent=11 // pred_fallthru
          _
        // Predicated region
        $region21: #{mymodel_forward.1} parent=11 // pred_check
          %p189 = pneg %p103
        $region22: #{mymodel_forward.1} parent=11 // pred_check_branch
          %191 = sbr.rel (%p189) target = $region24
        $region23: #{mymodel_forward.1} parent=11 // pred_region
          %s193 = ssub.s32 40960, 40960
          %194 = vsyncadd [#allocation5], %s193
          %s195 = sshll.u32 [#allocation6], 4
          %s196 = int_to_ptr.vmem [resolvable:$true] %s195
          %201 = dma.hbm_to_vmem [thread:$0]  %s3, 40960, %s196, [#allocation5], 256, 256, 16
        $region24: #{mymodel_forward.1} parent=11 // pred_fallthru
          _
        // Predicated region
        $region25: #{mymodel_forward.1} parent=11 // pred_check
          %p202 = pneg %p124
        $region26: #{mymodel_forward.1} parent=11 // pred_check_branch
          %204 = sbr.rel (%p202) target = $region28
        $region27: #{mymodel_forward.1} parent=11 // pred_region
          %s206 = ssub.s32 64, 64
          %207 = vsyncadd [#allocation8], %s206
          %s209 = sshll.u32 [#allocation7], 4
          %s210 = int_to_ptr.vmem [resolvable:$true] %s209
          %212 = dma.hbm_to_vmem [thread:$0]  %s4, 64, %s210, [#allocation8]
        $region28: #{mymodel_forward.1} parent=11 // pred_fallthru
          _
      $region12: #{mymodel_forward.1} parent=5 // pred_fallthru
        _
      %p213 = scmp.lt.s32.totalorder %s14, 2
      // Predicated region
      $region29: #{mymodel_forward.1} parent=5 // pred_check
        %p214 = pneg %p213
      $region30: #{mymodel_forward.1} parent=5 // pred_check_branch
        %216 = sbr.rel (%p214) target = $region32
      $region31: #{mymodel_forward.1} parent=5 // pred_region
        // Predicated region
        $region33: #{mymodel_forward.1} parent=31 // pred_check
          %p217 = pneg %p34
        $region34: #{mymodel_forward.1} parent=31 // pred_check_branch
          %219 = sbr.rel (%p217) target = $region36
        $region35: #{mymodel_forward.1} parent=31 // pred_region
          %s220 = smul.u32 3, %s14
          %p221 = scmp.lt.s32.totalorder %s220, 5
          %s222 = scalar_select %p221, %s220, 5
          %s223 = smul.addr %s222, 2
          %s224 = smul.addr %s223, 4
          %s225 = scalar_lea.vmem %s0, %s224
          %s226 = smul.u32 3, %s14
        $region36: #{mymodel_forward.1} parent=31 // pred_fallthru
          _
      $region32: #{mymodel_forward.1} parent=5 // pred_fallthru
        _
      %p227 = scmp.le.s32.totalorder 1, %s14
      %p228 = scmp.lt.s32.totalorder %s14, 3
      %p229 = pnand %p227, %p228
      %p230 = pneg %p229
      // Predicated region
      $region37: #{mymodel_forward.1} parent=5 // pred_check
        _
      $region38: #{mymodel_forward.1} parent=5 // pred_check_branch
        %232 = sbr.rel (%p229) target = $region40
      $region39: #{mymodel_forward.1} parent=5 // pred_region
        %s233 = ssub.s32 %s14, 1
        // Predicated region
        $region41: #{mymodel_forward.1} parent=39 // pred_check
          %p234 = pneg %p61
        $region42: #{mymodel_forward.1} parent=39 // pred_check_branch
          %236 = sbr.rel (%p234) target = $region44
        $region43: #{mymodel_forward.1} parent=39 // pred_region
          %237 = dma.done [#allocation3], 4608
        $region44: #{mymodel_forward.1} parent=39 // pred_fallthru
          _
        // Predicated region
        $region45: #{mymodel_forward.1} parent=39 // pred_check
          %p238 = pneg %p82
        $region46: #{mymodel_forward.1} parent=39 // pred_check_branch
          %240 = sbr.rel (%p238) target = $region48
        $region47: #{mymodel_forward.1} parent=39 // pred_region
          %241 = dma.done [#allocation5], 64
        $region48: #{mymodel_forward.1} parent=39 // pred_fallthru
          _
        // Predicated region
        $region49: #{mymodel_forward.1} parent=39 // pred_check
          %p242 = pneg %p103
        $region50: #{mymodel_forward.1} parent=39 // pred_check_branch
          %244 = sbr.rel (%p242) target = $region52
        $region51: #{mymodel_forward.1} parent=39 // pred_region
          %245 = dma.done [#allocation5], 40960
        $region52: #{mymodel_forward.1} parent=39 // pred_fallthru
          _
        // Predicated region
        $region53: #{mymodel_forward.1} parent=39 // pred_check
          %p246 = pneg %p124
        $region54: #{mymodel_forward.1} parent=39 // pred_check_branch
          %248 = sbr.rel (%p246) target = $region56
        $region55: #{mymodel_forward.1} parent=39 // pred_region
          %249 = dma.done [#allocation8], 64
        $region56: #{mymodel_forward.1} parent=39 // pred_fallthru
          _
        %s250 = smul.u32 3, %s19
        %p251 = scmp.lt.s32.totalorder %s250, 5
        %s252 = scalar_select %p251, %s250, 5
        %s253 = smul.addr %s252, 2
        %s254 = smul.addr %s253, 4
        %s255 = scalar_lea.vmem %s0, %s254
        %p256 = pneg %p40
        %p257 = pneg %p37
        %p258 = pneg %p61
        %p259 = pneg %p58
        %p260 = pneg %p82
        %p261 = pneg %p79
        %p262 = pneg %p103
        %p263 = pneg %p100
        %p264 = pneg %p124
        %p265 = pneg %p121
        %p266 = pneg %p150
        %p267 = pneg %p147
        %p268 = scmp.lt.s32.totalorder %s19, 1
        %s269 = scalar_select %p268, %s19, 1
        %s270 = smul.addr %s269, 4
        %s271 = smul.addr %s270, 8
        %s272 = scalar_lea.vmem %s5, %s271
        %s273 = smul.u32 3, %s19
        %p274 = scmp.lt.s32.totalorder %s273, 5
        %s275 = scalar_select %p274, %s273, 5
        %s276 = smul.addr %s275, 2
        %s277 = smul.addr %s276, 4
        %s278 = scalar_lea.vmem %s0, %s277
        %s279 = smul.u32 3, %s19
        %p280 = scmp.lt.s32.totalorder %s19, 1
        %s281 = scalar_select %p280, %s19, 1
        %s282 = smul.addr %s281, 4
        %s283 = smul.addr %s282, 8
        %s284 = scalar_lea.vmem %s5, %s283
        %v286 = vld [vmem:[%s278] sm:$0xff]
        %v287 = vld [vmem:[%s278 + $0x8] sm:$0xff]
        %v288 = vld [vmem:[%s278 + $0x10] sm:$0xff]
        %v289 = vld [vmem:[#allocation2] sm:$0xff]
        %v290 = vld [vmem:[#allocation2 + $0x8] sm:$0xff]
        %v291 = vld [vmem:[#allocation2 + $0x10] sm:$0xff]
        %v292 = vld [vmem:[#allocation2 + $0x18] sm:$0xff]
        %v293 = vld [vmem:[#allocation2 + $0x20] sm:$0xff]
        %v294 = vld [vmem:[#allocation2 + $0x28] sm:$0xff]
        %v295 = vld [vmem:[#allocation2 + $0x30] sm:$0xff]
        %v296 = vld [vmem:[#allocation2 + $0x38] sm:$0xff]
        %v297 = vld [vmem:[#allocation2 + $0x40] sm:$0xff]
        %v298 = vld [vmem:[#allocation2 + $0x48] sm:$0xff]
        %v299 = vld [vmem:[#allocation2 + $0x50] sm:$0xff]
        %v300 = vld [vmem:[#allocation2 + $0x58] sm:$0xff]
        %v301 = vld [vmem:[#allocation2 + $0x60] sm:$0xff]
        %v302 = vld [vmem:[#allocation2 + $0x68] sm:$0xff]
        %v303 = vld [vmem:[#allocation2 + $0x70] sm:$0xff]
        %v304 = vld [vmem:[#allocation2 + $0x78] sm:$0xff]
        %v305 = vld [vmem:[#allocation2 + $0x80] sm:$0xff]
        %v306 = vld [vmem:[#allocation2 + $0x88] sm:$0xff]
        %v307 = vld [vmem:[#allocation2 + $0x90] sm:$0xff]
        %v308 = vld [vmem:[#allocation2 + $0x98] sm:$0xff]
        %v309 = vld [vmem:[#allocation2 + $0xa0] sm:$0xff]
        %v310 = vld [vmem:[#allocation2 + $0xa8] sm:$0xff]
        %v311 = vld [vmem:[#allocation2 + $0xb0] sm:$0xff]
        %v312 = vld [vmem:[#allocation2 + $0xb8] sm:$0xff]
        %v313 = vld [vmem:[#allocation2 + $0xc0] sm:$0xff]
        %v314 = vld [vmem:[#allocation2 + $0xc8] sm:$0xff]
        %v315 = vld [vmem:[#allocation2 + $0xd0] sm:$0xff]
        %v316 = vld [vmem:[#allocation2 + $0xd8] sm:$0xff]
        %v317 = vld [vmem:[#allocation2 + $0xe0] sm:$0xff]
        %v318 = vld [vmem:[#allocation2 + $0xe8] sm:$0xff]
        %v319 = vld [vmem:[#allocation2 + $0xf0] sm:$0xff]
        %v320 = vld [vmem:[#allocation2 + $0xf8] sm:$0xff]
        %v321 = vld [vmem:[#allocation2 + $0x100] sm:$0xff]
        %v322 = vld [vmem:[#allocation2 + $0x108] sm:$0xff]
        %v323 = vld [vmem:[#allocation2 + $0x110] sm:$0x33]
        %v324 = vld [vmem:[#allocation2 + $0x118] sm:$0x33]
        %v325 = vld [vmem:[#allocation4] sm:$0xf]
        %v327 = vlaneseq
        %v328 = vshrl.u32 %v327, 7
        %v329 = vsub.s32 0, %v328
        %v330 = vrot.slane %v325, %v329
        %v331 = vlaneseq
        %v332 = vshrl.u32 %v331, 7
        %v333 = vsub.s32 1, %v332
        %v334 = vrot.slane %v325, %v333
        %v335 = vlaneseq
        %v336 = vshrl.u32 %v335, 7
        %v337 = vsub.s32 2, %v336
        %v338 = vrot.slane %v325, %v337
        %v339 = vlaneseq
        %v340 = vshrl.u32 %v339, 7
        %v341 = vsub.s32 3, %v340
        %v342 = vrot.slane %v325, %v341
        %v350 = vunpack.c.l.b16 %v286
        %v351 = vunpack.c.h.b16 %v286
        %v352 = vunpack.c.l.b16 %v287
        %v353 = vunpack.c.h.b16 %v287
        %v354 = vunpack.c.l.b16 %v288
        %v355 = vunpack.c.h.b16 %v288
        %v356 = vpack.c.b16 %v352, %v350
        %v357 = vpack.c.b16 %v353, %v351
        %v358 = vpack.c.b16 %v354, %v354
        %v359 = vpack.c.b16 %v355, %v355
        %v398 = vunpack.c.l.b16 %v289
        %v399 = vunpack.c.h.b16 %v289
        %v400 = vunpack.c.l.b16 %v290
        %v401 = vunpack.c.h.b16 %v290
        %v402 = vunpack.c.l.b16 %v291
        %v403 = vunpack.c.h.b16 %v291
        %v404 = vunpack.c.l.b16 %v292
        %v405 = vunpack.c.h.b16 %v292
        %v406 = vunpack.c.l.b16 %v293
        %v407 = vunpack.c.h.b16 %v293
        %v408 = vunpack.c.l.b16 %v294
        %v409 = vunpack.c.h.b16 %v294
        %v410 = vunpack.c.l.b16 %v295
        %v411 = vunpack.c.h.b16 %v295
        %v412 = vunpack.c.l.b16 %v296
        %v413 = vunpack.c.h.b16 %v296
        %v414 = vunpack.c.l.b16 %v297
        %v415 = vunpack.c.h.b16 %v297
        %v416 = vunpack.c.l.b16 %v298
        %v417 = vunpack.c.h.b16 %v298
        %v418 = vunpack.c.l.b16 %v299
        %v419 = vunpack.c.h.b16 %v299
        %v420 = vunpack.c.l.b16 %v300
        %v421 = vunpack.c.h.b16 %v300
        %v422 = vunpack.c.l.b16 %v301
        %v423 = vunpack.c.h.b16 %v301
        %v424 = vunpack.c.l.b16 %v302
        %v425 = vunpack.c.h.b16 %v302
        %v426 = vunpack.c.l.b16 %v303
        %v427 = vunpack.c.h.b16 %v303
        %v428 = vunpack.c.l.b16 %v304
        %v429 = vunpack.c.h.b16 %v304
        %v430 = vunpack.c.l.b16 %v305
        %v431 = vunpack.c.h.b16 %v305
        %v432 = vunpack.c.l.b16 %v306
        %v433 = vunpack.c.h.b16 %v306
        %v434 = vunpack.c.l.b16 %v307
        %v435 = vunpack.c.h.b16 %v307
        %v436 = vunpack.c.l.b16 %v308
        %v437 = vunpack.c.h.b16 %v308
        %v438 = vunpack.c.l.b16 %v309
        %v439 = vunpack.c.h.b16 %v309
        %v440 = vunpack.c.l.b16 %v310
        %v441 = vunpack.c.h.b16 %v310
        %v442 = vunpack.c.l.b16 %v311
        %v443 = vunpack.c.h.b16 %v311
        %v444 = vunpack.c.l.b16 %v312
        %v445 = vunpack.c.h.b16 %v312
        %v446 = vunpack.c.l.b16 %v313
        %v447 = vunpack.c.h.b16 %v313
        %v448 = vunpack.c.l.b16 %v314
        %v449 = vunpack.c.h.b16 %v314
        %v450 = vunpack.c.l.b16 %v315
        %v451 = vunpack.c.h.b16 %v315
        %v452 = vunpack.c.l.b16 %v316
        %v453 = vunpack.c.h.b16 %v316
        %v454 = vunpack.c.l.b16 %v317
        %v455 = vunpack.c.h.b16 %v317
        %v456 = vunpack.c.l.b16 %v318
        %v457 = vunpack.c.h.b16 %v318
        %v458 = vunpack.c.l.b16 %v319
        %v459 = vunpack.c.h.b16 %v319
        %v460 = vunpack.c.l.b16 %v320
        %v461 = vunpack.c.h.b16 %v320
        %v462 = vunpack.c.l.b16 %v321
        %v463 = vunpack.c.h.b16 %v321
        %v464 = vunpack.c.l.b16 %v322
        %v465 = vunpack.c.h.b16 %v322
        %v466 = vunpack.c.l.b16 %v323
        %v467 = vunpack.c.h.b16 %v323
        %v468 = vunpack.c.l.b16 %v324
        %v469 = vunpack.c.h.b16 %v324
        %v470 = vpack.c.b16 %v402, %v398
        %v471 = vpack.c.b16 %v403, %v399
        %v472 = vpack.c.b16 %v404, %v400
        %v473 = vpack.c.b16 %v405, %v401
        %v474 = vpack.c.b16 %v410, %v406
        %v475 = vpack.c.b16 %v411, %v407
        %v476 = vpack.c.b16 %v412, %v408
        %v477 = vpack.c.b16 %v413, %v409
        %v478 = vpack.c.b16 %v418, %v414
        %v479 = vpack.c.b16 %v419, %v415
        %v480 = vpack.c.b16 %v420, %v416
        %v481 = vpack.c.b16 %v421, %v417
        %v482 = vpack.c.b16 %v426, %v422
        %v483 = vpack.c.b16 %v427, %v423
        %v484 = vpack.c.b16 %v428, %v424
        %v485 = vpack.c.b16 %v429, %v425
        %v486 = vpack.c.b16 %v434, %v430
        %v487 = vpack.c.b16 %v435, %v431
        %v488 = vpack.c.b16 %v436, %v432
        %v489 = vpack.c.b16 %v437, %v433
        %v490 = vpack.c.b16 %v442, %v438
        %v491 = vpack.c.b16 %v443, %v439
        %v492 = vpack.c.b16 %v444, %v440
        %v493 = vpack.c.b16 %v445, %v441
        %v494 = vpack.c.b16 %v450, %v446
        %v495 = vpack.c.b16 %v451, %v447
        %v496 = vpack.c.b16 %v452, %v448
        %v497 = vpack.c.b16 %v453, %v449
        %v498 = vpack.c.b16 %v458, %v454
        %v499 = vpack.c.b16 %v459, %v455
        %v500 = vpack.c.b16 %v460, %v456
        %v501 = vpack.c.b16 %v461, %v457
        %v502 = vpack.c.b16 %v466, %v462
        %v503 = vpack.c.b16 %v467, %v463
        %v504 = vpack.c.b16 %v468, %v464
        %v505 = vpack.c.b16 %v469, %v465
        %vm538 = vcmask 97280
        %v540 = vsel %vm538, %v357, 0
        %v543 = vsel %vm538, %v359, 0
        %vm545 = vcmask 1045504
        %v547 = vsel %vm545, %v502, 0
        %v550 = vsel %vm545, %v503, 0
        %v553 = vsel %vm545, %v504, 0
        %v556 = vsel %vm545, %v505, 0
        %558 = vmatprep.subr.bf16.mxu0 %v471
        %559 = vmatpush1.bf16.msra.mxu0 %v470
        %560 = vmatprep.subr.bf16.mxu0 %v475
        %561 = vmatpush1.bf16.msra.mxu0 %v474
        %562 = vmatprep.subr.bf16.mxu0 %v479
        %563 = vmatpush1.bf16.msra.mxu0 %v478
        %564 = vmatprep.subr.bf16.mxu0 %v483
        %565 = vmatpush1.bf16.msra.mxu0 %v482
        %566 = vmatprep.subr.bf16.mxu0 %v487
        %567 = vmatpush1.bf16.msra.mxu0 %v486
        %568 = vmatprep.subr.bf16.mxu0 %v491
        %569 = vmatpush1.bf16.msra.mxu0 %v490
        %570 = vmatprep.subr.bf16.mxu0 %v495
        %571 = vmatpush1.bf16.msra.mxu0 %v494
        %572 = vmatprep.subr.bf16.mxu0 %v499
        %573 = vmatpush1.bf16.msra.mxu0 %v498
        %574 = vmatprep.subr.bf16.mxu0 %v550
        %575 = vmatpush1.bf16.msra.mxu0 %v547
        %576 = vmatprep.subr.bf16.mxu0 0
        %577 = vmatpush1.bf16.msra.mxu0 0
        %578 = vmatprep.subr.bf16.mxu0 0
        %579 = vmatpush1.bf16.msra.mxu0 0
        %580 = vmatprep.subr.bf16.mxu0 0
        %581 = vmatpush1.bf16.msra.mxu0 0
        %582 = vmatprep.subr.bf16.mxu0 0
        %583 = vmatpush1.bf16.msra.mxu0 0
        %584 = vmatprep.subr.bf16.mxu0 0
        %585 = vmatpush1.bf16.msra.mxu0 0
        %586 = vmatprep.subr.bf16.mxu0 0
        %587 = vmatpush1.bf16.msra.mxu0 0
        %588 = vmatprep.subr.bf16.mxu0 0
        %589 = vmatpush1.bf16.msra.mxu0 0
        %590 = vmatprep.mubr.bf16.mxu0 %v540
        %591 = vmatmul.mubr.bf16.gmra.mrb[0].mxu0 %v356
        %v592 = vpop.f32.mrb[0].mxu0
        %v593 = vadd.f32 %v330, %v592
        %v594 = vpop.f32.mrb[0].mxu0
        %v595 = vadd.f32 %v334, %v594
        %v596 = vpop.f32.mrb[0].mxu0
        %v597 = vadd.f32 %v330, %v596
        %v598 = vpop.f32.mrb[0].mxu0
        %v599 = vadd.f32 %v334, %v598
        %600 = vmatprep.mubr.bf16.mxu0 %v543
        %601 = vmatmul.mubr.bf16.gmra.mrb[0].mxu0 %v358
        %v602 = vpop.f32.mrb[0].mxu0
        %v603 = vadd.f32 %v330, %v602
        %v604 = vpop.f32.mrb[0].mxu0
        %v605 = vadd.f32 %v334, %v604
        %v606 = vpop.f32.mrb[0].mxu0
        %v607 = vpop.f32.mrb[0].mxu0
        %608 = vdwg.mxu0
        %609 = vmatprep.subr.bf16.mxu0 %v473
        %610 = vmatpush1.bf16.msra.mxu0 %v472
        %611 = vmatprep.subr.bf16.mxu0 %v477
        %612 = vmatpush1.bf16.msra.mxu0 %v476
        %613 = vmatprep.subr.bf16.mxu0 %v481
        %614 = vmatpush1.bf16.msra.mxu0 %v480
        %615 = vmatprep.subr.bf16.mxu0 %v485
        %616 = vmatpush1.bf16.msra.mxu0 %v484
        %617 = vmatprep.subr.bf16.mxu0 %v489
        %618 = vmatpush1.bf16.msra.mxu0 %v488
        %619 = vmatprep.subr.bf16.mxu0 %v493
        %620 = vmatpush1.bf16.msra.mxu0 %v492
        %621 = vmatprep.subr.bf16.mxu0 %v497
        %622 = vmatpush1.bf16.msra.mxu0 %v496
        %623 = vmatprep.subr.bf16.mxu0 %v501
        %624 = vmatpush1.bf16.msra.mxu0 %v500
        %625 = vmatprep.subr.bf16.mxu0 %v556
        %626 = vmatpush1.bf16.msra.mxu0 %v553
        %627 = vmatprep.subr.bf16.mxu0 0
        %628 = vmatpush1.bf16.msra.mxu0 0
        %629 = vmatprep.subr.bf16.mxu0 0
        %630 = vmatpush1.bf16.msra.mxu0 0
        %631 = vmatprep.subr.bf16.mxu0 0
        %632 = vmatpush1.bf16.msra.mxu0 0
        %633 = vmatprep.subr.bf16.mxu0 0
        %634 = vmatpush1.bf16.msra.mxu0 0
        %635 = vmatprep.subr.bf16.mxu0 0
        %636 = vmatpush1.bf16.msra.mxu0 0
        %637 = vmatprep.subr.bf16.mxu0 0
        %638 = vmatpush1.bf16.msra.mxu0 0
        %639 = vmatprep.subr.bf16.mxu0 0
        %640 = vmatpush1.bf16.msra.mxu0 0
        %641 = vmatprep.mubr.bf16.mxu0 %v540
        %642 = vmatmul.mubr.bf16.gmra.mrb[0].mxu0 %v356
        %v643 = vpop.f32.mrb[0].mxu0
        %v644 = vadd.f32 %v338, %v643
        %v645 = vpop.f32.mrb[0].mxu0
        %v646 = vadd.f32 %v342, %v645
        %v647 = vpop.f32.mrb[0].mxu0
        %v648 = vadd.f32 %v338, %v647
        %v649 = vpop.f32.mrb[0].mxu0
        %v650 = vadd.f32 %v342, %v649
        %651 = vmatprep.mubr.bf16.mxu0 %v543
        %652 = vmatmul.mubr.bf16.gmra.mrb[0].mxu0 %v358
        %v653 = vpop.f32.mrb[0].mxu0
        %v654 = vadd.f32 %v338, %v653
        %v655 = vpop.f32.mrb[0].mxu0
        %v656 = vadd.f32 %v342, %v655
        %v657 = vpop.f32.mrb[0].mxu0
        %v658 = vpop.f32.mrb[0].mxu0
        %659 = vdwg.mxu0
        %v660 = vmax.f32 %v593, 0.0
        %v661 = vmax.f32 %v595, 0.0
        %v662 = vmax.f32 %v644, 0.0
        %v663 = vmax.f32 %v646, 0.0
        %v664 = vmax.f32 %v597, 0.0
        %v665 = vmax.f32 %v599, 0.0
        %v666 = vmax.f32 %v648, 0.0
        %v667 = vmax.f32 %v650, 0.0
        %v668 = vmax.f32 %v603, 0.0
        %v669 = vmax.f32 %v605, 0.0
        %v670 = vmax.f32 %v654, 0.0
        %v671 = vmax.f32 %v656, 0.0
        %vm680 = vcmask 1043456
        %v681 = vrot.slane %v664, 4
        %v682 = vrot.slane %v668, 4
        %v683 = vsel %vm680, %v681, %v682
        %v684 = vrot.slane %v665, 4
        %v685 = vrot.slane %v669, 4
        %v686 = vsel %vm680, %v684, %v685
        %v687 = vrot.slane %v666, 4
        %v688 = vrot.slane %v670, 4
        %v689 = vsel %vm680, %v687, %v688
        %v690 = vrot.slane %v667, 4
        %v691 = vrot.slane %v671, 4
        %v692 = vsel %vm680, %v690, %v691
        %v701 = vmax.f32 %v660, %v683
        %v702 = vmax.f32 %v661, %v686
        %v703 = vmax.f32 %v662, %v689
        %v704 = vmax.f32 %v663, %v692
        %v705 = vmax.f32 %v664, %v682
        %v706 = vmax.f32 %v665, %v685
        %v707 = vmax.f32 %v666, %v688
        %v708 = vmax.f32 %v667, %v691
        %v709 = vmax.f32 %v701, %v703
        %v710 = vmax.f32 %v702, %v704
        %v711 = vmax.f32 %v705, %v707
        %v712 = vmax.f32 %v706, %v708
        %v713 = vpack.c.bf16 %v711, %v709
        %v714 = vpack.c.bf16 %v712, %v710
        %v716 = vshrl.u32 %v713, 16
        %v718 = vshll.u32 %v713, 16
        %v720 = vrot.slane %v718, 1
        %v721 = vor.u32 %v716, %v720
        %v723 = vshrl.u32 %v714, 16
        %v725 = vshll.u32 %v714, 16
        %v727 = vrot.slane %v725, 1
        %v728 = vor.u32 %v723, %v727
        %v733 = vrot.slane %v713, 1
        %v734 = vrot.slane %v714, 1
        %v737 = vrot.slane %v716, 1
        %v738 = vrot.slane %v718, 2
        %v739 = vor.u32 %v737, %v738
        %v740 = vrot.slane %v723, 1
        %v741 = vrot.slane %v725, 2
        %v742 = vor.u32 %v740, %v741
        %v745 = vrot.slane %v713, 2
        %v746 = vrot.slane %v714, 2
        %v749 = vld [vmem:[#allocation6] sm:$0xff]
        %v750 = vld [vmem:[#allocation6 + $0x8] sm:$0xff]
        %v751 = vld [vmem:[#allocation6 + $0x10] sm:$0xff]
        %v752 = vld [vmem:[#allocation6 + $0x18] sm:$0xff]
        %v753 = vld [vmem:[#allocation6 + $0x20] sm:$0xff]
        %v754 = vld [vmem:[#allocation6 + $0x28] sm:$0xff]
        %v755 = vld [vmem:[#allocation6 + $0x30] sm:$0xff]
        %v756 = vld [vmem:[#allocation6 + $0x38] sm:$0xff]
        %v757 = vld [vmem:[#allocation6 + $0x40] sm:$0xff]
        %v758 = vld [vmem:[#allocation6 + $0x48] sm:$0xff]
        %v759 = vld [vmem:[#allocation6 + $0x50] sm:$0xff]
        %v760 = vld [vmem:[#allocation6 + $0x58] sm:$0xff]
        %v761 = vld [vmem:[#allocation6 + $0x60] sm:$0xff]
        %v762 = vld [vmem:[#allocation6 + $0x68] sm:$0xff]
        %v763 = vld [vmem:[#allocation6 + $0x70] sm:$0xff]
        %v764 = vld [vmem:[#allocation6 + $0x78] sm:$0xff]
        %v765 = vld [vmem:[#allocation6 + $0x80] sm:$0xff]
        %v766 = vld [vmem:[#allocation6 + $0x88] sm:$0xff]
        %v767 = vld [vmem:[#allocation6 + $0x90] sm:$0xff]
        %v768 = vld [vmem:[#allocation6 + $0x98] sm:$0xff]
        %v769 = vld [vmem:[#allocation6 + $0xa0] sm:$0xff]
        %v770 = vld [vmem:[#allocation6 + $0xa8] sm:$0xff]
        %v771 = vld [vmem:[#allocation6 + $0xb0] sm:$0xff]
        %v772 = vld [vmem:[#allocation6 + $0xb8] sm:$0xff]
        %v773 = vld [vmem:[#allocation6 + $0xc0] sm:$0xff]
        %v774 = vld [vmem:[#allocation6 + $0xc8] sm:$0xff]
        %v775 = vld [vmem:[#allocation6 + $0xd0] sm:$0xff]
        %v776 = vld [vmem:[#allocation6 + $0xd8] sm:$0xff]
        %v777 = vld [vmem:[#allocation6 + $0xe0] sm:$0xff]
        %v778 = vld [vmem:[#allocation6 + $0xe8] sm:$0xff]
        %v779 = vld [vmem:[#allocation6 + $0xf0] sm:$0xff]
        %v780 = vld [vmem:[#allocation6 + $0xf8] sm:$0xff]
        %v781 = vld [vmem:[#allocation6 + $0x100] sm:$0xff]
        %v782 = vld [vmem:[#allocation6 + $0x108] sm:$0xff]
        %v783 = vld [vmem:[#allocation6 + $0x110] sm:$0xff]
        %v784 = vld [vmem:[#allocation6 + $0x118] sm:$0xff]
        %v785 = vld [vmem:[#allocation6 + $0x120] sm:$0xff]
        %v786 = vld [vmem:[#allocation6 + $0x128] sm:$0xff]
        %v787 = vld [vmem:[#allocation6 + $0x130] sm:$0xff]
        %v788 = vld [vmem:[#allocation6 + $0x138] sm:$0xff]
        %v789 = vld [vmem:[#allocation6 + $0x140] sm:$0xff]
        %v790 = vld [vmem:[#allocation6 + $0x148] sm:$0xff]
        %v791 = vld [vmem:[#allocation6 + $0x150] sm:$0xff]
        %v792 = vld [vmem:[#allocation6 + $0x158] sm:$0xff]
        %v793 = vld [vmem:[#allocation6 + $0x160] sm:$0xff]
        %v794 = vld [vmem:[#allocation6 + $0x168] sm:$0xff]
        %v795 = vld [vmem:[#allocation6 + $0x170] sm:$0xff]
        %v796 = vld [vmem:[#allocation6 + $0x178] sm:$0xff]
        %v797 = vld [vmem:[#allocation6 + $0x180] sm:$0xff]
        %v798 = vld [vmem:[#allocation6 + $0x188] sm:$0xff]
        %v799 = vld [vmem:[#allocation6 + $0x190] sm:$0xff]
        %v800 = vld [vmem:[#allocation6 + $0x198] sm:$0xff]
        %v801 = vld [vmem:[#allocation6 + $0x1a0] sm:$0xff]
        %v802 = vld [vmem:[#allocation6 + $0x1a8] sm:$0xff]
        %v803 = vld [vmem:[#allocation6 + $0x1b0] sm:$0xff]
        %v804 = vld [vmem:[#allocation6 + $0x1b8] sm:$0xff]
        %v805 = vld [vmem:[#allocation6 + $0x1c0] sm:$0xff]
        %v806 = vld [vmem:[#allocation6 + $0x1c8] sm:$0xff]
        %v807 = vld [vmem:[#allocation6 + $0x1d0] sm:$0xff]
        %v808 = vld [vmem:[#allocation6 + $0x1d8] sm:$0xff]
        %v809 = vld [vmem:[#allocation6 + $0x1e0] sm:$0xff]
        %v810 = vld [vmem:[#allocation6 + $0x1e8] sm:$0xff]
        %v811 = vld [vmem:[#allocation6 + $0x1f0] sm:$0xff]
        %v812 = vld [vmem:[#allocation6 + $0x1f8] sm:$0xff]
        %v813 = vld [vmem:[#allocation6 + $0x200] sm:$0xff]
        %v814 = vld [vmem:[#allocation6 + $0x208] sm:$0xff]
        %v815 = vld [vmem:[#allocation6 + $0x210] sm:$0xff]
        %v816 = vld [vmem:[#allocation6 + $0x218] sm:$0xff]
        %v817 = vld [vmem:[#allocation6 + $0x220] sm:$0xff]
        %v818 = vld [vmem:[#allocation6 + $0x228] sm:$0xff]
        %v819 = vld [vmem:[#allocation6 + $0x230] sm:$0xff]
        %v820 = vld [vmem:[#allocation6 + $0x238] sm:$0xff]
        %v821 = vld [vmem:[#allocation6 + $0x240] sm:$0xff]
        %v822 = vld [vmem:[#allocation6 + $0x248] sm:$0xff]
        %v823 = vld [vmem:[#allocation6 + $0x250] sm:$0xff]
        %v824 = vld [vmem:[#allocation6 + $0x258] sm:$0xff]
        %v825 = vld [vmem:[#allocation6 + $0x260] sm:$0xff]
        %v826 = vld [vmem:[#allocation6 + $0x268] sm:$0xff]
        %v827 = vld [vmem:[#allocation6 + $0x270] sm:$0xff]
        %v828 = vld [vmem:[#allocation6 + $0x278] sm:$0xff]
        %v829 = vld [vmem:[#allocation6 + $0x280] sm:$0xff]
        %v830 = vld [vmem:[#allocation6 + $0x288] sm:$0xff]
        %v831 = vld [vmem:[#allocation6 + $0x290] sm:$0xff]
        %v832 = vld [vmem:[#allocation6 + $0x298] sm:$0xff]
        %v833 = vld [vmem:[#allocation6 + $0x2a0] sm:$0xff]
        %v834 = vld [vmem:[#allocation6 + $0x2a8] sm:$0xff]
        %v835 = vld [vmem:[#allocation6 + $0x2b0] sm:$0xff]
        %v836 = vld [vmem:[#allocation6 + $0x2b8] sm:$0xff]
        %v837 = vld [vmem:[#allocation6 + $0x2c0] sm:$0xff]
        %v838 = vld [vmem:[#allocation6 + $0x2c8] sm:$0xff]
        %v839 = vld [vmem:[#allocation6 + $0x2d0] sm:$0xff]
        %v840 = vld [vmem:[#allocation6 + $0x2d8] sm:$0xff]
        %v841 = vld [vmem:[#allocation6 + $0x2e0] sm:$0xff]
        %v842 = vld [vmem:[#allocation6 + $0x2e8] sm:$0xff]
        %v843 = vld [vmem:[#allocation6 + $0x2f0] sm:$0xff]
        %v844 = vld [vmem:[#allocation6 + $0x2f8] sm:$0xff]
        %v845 = vld [vmem:[#allocation6 + $0x300] sm:$0xff]
        %v846 = vld [vmem:[#allocation6 + $0x308] sm:$0xff]
        %v847 = vld [vmem:[#allocation6 + $0x310] sm:$0xff]
        %v848 = vld [vmem:[#allocation6 + $0x318] sm:$0xff]
        %v849 = vld [vmem:[#allocation6 + $0x320] sm:$0xff]
        %v850 = vld [vmem:[#allocation6 + $0x328] sm:$0xff]
        %v851 = vld [vmem:[#allocation6 + $0x330] sm:$0xff]
        %v852 = vld [vmem:[#allocation6 + $0x338] sm:$0xff]
        %v853 = vld [vmem:[#allocation6 + $0x340] sm:$0xff]
        %v854 = vld [vmem:[#allocation6 + $0x348] sm:$0xff]
        %v855 = vld [vmem:[#allocation6 + $0x350] sm:$0xff]
        %v856 = vld [vmem:[#allocation6 + $0x358] sm:$0xff]
        %v857 = vld [vmem:[#allocation6 + $0x360] sm:$0xff]
        %v858 = vld [vmem:[#allocation6 + $0x368] sm:$0xff]
        %v859 = vld [vmem:[#allocation6 + $0x370] sm:$0xff]
        %v860 = vld [vmem:[#allocation6 + $0x378] sm:$0xff]
        %v861 = vld [vmem:[#allocation6 + $0x380] sm:$0xff]
        %v862 = vld [vmem:[#allocation6 + $0x388] sm:$0xff]
        %v863 = vld [vmem:[#allocation6 + $0x390] sm:$0xff]
        %v864 = vld [vmem:[#allocation6 + $0x398] sm:$0xff]
        %v865 = vld [vmem:[#allocation6 + $0x3a0] sm:$0xff]
        %v866 = vld [vmem:[#allocation6 + $0x3a8] sm:$0xff]
        %v867 = vld [vmem:[#allocation6 + $0x3b0] sm:$0xff]
        %v868 = vld [vmem:[#allocation6 + $0x3b8] sm:$0xff]
        %v869 = vld [vmem:[#allocation6 + $0x3c0] sm:$0xff]
        %v870 = vld [vmem:[#allocation6 + $0x3c8] sm:$0xff]
        %v871 = vld [vmem:[#allocation6 + $0x3d0] sm:$0xff]
        %v872 = vld [vmem:[#allocation6 + $0x3d8] sm:$0xff]
        %v873 = vld [vmem:[#allocation6 + $0x3e0] sm:$0xff]
        %v874 = vld [vmem:[#allocation6 + $0x3e8] sm:$0xff]
        %v875 = vld [vmem:[#allocation6 + $0x3f0] sm:$0xff]
        %v876 = vld [vmem:[#allocation6 + $0x3f8] sm:$0xff]
        %v877 = vld [vmem:[#allocation6 + $0x400] sm:$0xff]
        %v878 = vld [vmem:[#allocation6 + $0x408] sm:$0xff]
        %v879 = vld [vmem:[#allocation6 + $0x410] sm:$0xff]
        %v880 = vld [vmem:[#allocation6 + $0x418] sm:$0xff]
        %v881 = vld [vmem:[#allocation6 + $0x420] sm:$0xff]
        %v882 = vld [vmem:[#allocation6 + $0x428] sm:$0xff]
        %v883 = vld [vmem:[#allocation6 + $0x430] sm:$0xff]
        %v884 = vld [vmem:[#allocation6 + $0x438] sm:$0xff]
        %v885 = vld [vmem:[#allocation6 + $0x440] sm:$0xff]
        %v886 = vld [vmem:[#allocation6 + $0x448] sm:$0xff]
        %v887 = vld [vmem:[#allocation6 + $0x450] sm:$0xff]
        %v888 = vld [vmem:[#allocation6 + $0x458] sm:$0xff]
        %v889 = vld [vmem:[#allocation6 + $0x460] sm:$0xff]
        %v890 = vld [vmem:[#allocation6 + $0x468] sm:$0xff]
        %v891 = vld [vmem:[#allocation6 + $0x470] sm:$0xff]
        %v892 = vld [vmem:[#allocation6 + $0x478] sm:$0xff]
        %v893 = vld [vmem:[#allocation6 + $0x480] sm:$0xff]
        %v894 = vld [vmem:[#allocation6 + $0x488] sm:$0xff]
        %v895 = vld [vmem:[#allocation6 + $0x490] sm:$0xff]
        %v896 = vld [vmem:[#allocation6 + $0x498] sm:$0xff]
        %v897 = vld [vmem:[#allocation6 + $0x4a0] sm:$0xff]
        %v898 = vld [vmem:[#allocation6 + $0x4a8] sm:$0xff]
        %v899 = vld [vmem:[#allocation6 + $0x4b0] sm:$0xff]
        %v900 = vld [vmem:[#allocation6 + $0x4b8] sm:$0xff]
        %v901 = vld [vmem:[#allocation6 + $0x4c0] sm:$0xff]
        %v902 = vld [vmem:[#allocation6 + $0x4c8] sm:$0xff]
        %v903 = vld [vmem:[#allocation6 + $0x4d0] sm:$0xff]
        %v904 = vld [vmem:[#allocation6 + $0x4d8] sm:$0xff]
        %v905 = vld [vmem:[#allocation6 + $0x4e0] sm:$0xff]
        %v906 = vld [vmem:[#allocation6 + $0x4e8] sm:$0xff]
        %v907 = vld [vmem:[#allocation6 + $0x4f0] sm:$0xff]
        %v908 = vld [vmem:[#allocation6 + $0x4f8] sm:$0xff]
        %v909 = vld [vmem:[#allocation6 + $0x500] sm:$0xff]
        %v910 = vld [vmem:[#allocation6 + $0x508] sm:$0xff]
        %v911 = vld [vmem:[#allocation6 + $0x510] sm:$0xff]
        %v912 = vld [vmem:[#allocation6 + $0x518] sm:$0xff]
        %v913 = vld [vmem:[#allocation6 + $0x520] sm:$0xff]
        %v914 = vld [vmem:[#allocation6 + $0x528] sm:$0xff]
        %v915 = vld [vmem:[#allocation6 + $0x530] sm:$0xff]
        %v916 = vld [vmem:[#allocation6 + $0x538] sm:$0xff]
        %v917 = vld [vmem:[#allocation6 + $0x540] sm:$0xff]
        %v918 = vld [vmem:[#allocation6 + $0x548] sm:$0xff]
        %v919 = vld [vmem:[#allocation6 + $0x550] sm:$0xff]
        %v920 = vld [vmem:[#allocation6 + $0x558] sm:$0xff]
        %v921 = vld [vmem:[#allocation6 + $0x560] sm:$0xff]
        %v922 = vld [vmem:[#allocation6 + $0x568] sm:$0xff]
        %v923 = vld [vmem:[#allocation6 + $0x570] sm:$0xff]
        %v924 = vld [vmem:[#allocation6 + $0x578] sm:$0xff]
        %v925 = vld [vmem:[#allocation6 + $0x580] sm:$0xff]
        %v926 = vld [vmem:[#allocation6 + $0x588] sm:$0xff]
        %v927 = vld [vmem:[#allocation6 + $0x590] sm:$0xff]
        %v928 = vld [vmem:[#allocation6 + $0x598] sm:$0xff]
        %v929 = vld [vmem:[#allocation6 + $0x5a0] sm:$0xff]
        %v930 = vld [vmem:[#allocation6 + $0x5a8] sm:$0xff]
        %v931 = vld [vmem:[#allocation6 + $0x5b0] sm:$0xff]
        %v932 = vld [vmem:[#allocation6 + $0x5b8] sm:$0xff]
        %v933 = vld [vmem:[#allocation6 + $0x5c0] sm:$0xff]
        %v934 = vld [vmem:[#allocation6 + $0x5c8] sm:$0xff]
        %v935 = vld [vmem:[#allocation6 + $0x5d0] sm:$0xff]
        %v936 = vld [vmem:[#allocation6 + $0x5d8] sm:$0xff]
        %v937 = vld [vmem:[#allocation6 + $0x5e0] sm:$0xff]
        %v938 = vld [vmem:[#allocation6 + $0x5e8] sm:$0xff]
        %v939 = vld [vmem:[#allocation6 + $0x5f0] sm:$0xff]
        %v940 = vld [vmem:[#allocation6 + $0x5f8] sm:$0xff]
        %v941 = vld [vmem:[#allocation6 + $0x600] sm:$0xff]
        %v942 = vld [vmem:[#allocation6 + $0x608] sm:$0xff]
        %v943 = vld [vmem:[#allocation6 + $0x610] sm:$0xff]
        %v944 = vld [vmem:[#allocation6 + $0x618] sm:$0xff]
        %v945 = vld [vmem:[#allocation6 + $0x620] sm:$0xff]
        %v946 = vld [vmem:[#allocation6 + $0x628] sm:$0xff]
        %v947 = vld [vmem:[#allocation6 + $0x630] sm:$0xff]
        %v948 = vld [vmem:[#allocation6 + $0x638] sm:$0xff]
        %v949 = vld [vmem:[#allocation6 + $0x640] sm:$0xff]
        %v950 = vld [vmem:[#allocation6 + $0x648] sm:$0xff]
        %v951 = vld [vmem:[#allocation6 + $0x650] sm:$0xff]
        %v952 = vld [vmem:[#allocation6 + $0x658] sm:$0xff]
        %v953 = vld [vmem:[#allocation6 + $0x660] sm:$0xff]
        %v954 = vld [vmem:[#allocation6 + $0x668] sm:$0xff]
        %v955 = vld [vmem:[#allocation6 + $0x670] sm:$0xff]
        %v956 = vld [vmem:[#allocation6 + $0x678] sm:$0xff]
        %v957 = vld [vmem:[#allocation6 + $0x680] sm:$0xff]
        %v958 = vld [vmem:[#allocation6 + $0x688] sm:$0xff]
        %v959 = vld [vmem:[#allocation6 + $0x690] sm:$0xff]
        %v960 = vld [vmem:[#allocation6 + $0x698] sm:$0xff]
        %v961 = vld [vmem:[#allocation6 + $0x6a0] sm:$0xff]
        %v962 = vld [vmem:[#allocation6 + $0x6a8] sm:$0xff]
        %v963 = vld [vmem:[#allocation6 + $0x6b0] sm:$0xff]
        %v964 = vld [vmem:[#allocation6 + $0x6b8] sm:$0xff]
        %v965 = vld [vmem:[#allocation6 + $0x6c0] sm:$0xff]
        %v966 = vld [vmem:[#allocation6 + $0x6c8] sm:$0xff]
        %v967 = vld [vmem:[#allocation6 + $0x6d0] sm:$0xff]
        %v968 = vld [vmem:[#allocation6 + $0x6d8] sm:$0xff]
        %v969 = vld [vmem:[#allocation6 + $0x6e0] sm:$0xff]
        %v970 = vld [vmem:[#allocation6 + $0x6e8] sm:$0xff]
        %v971 = vld [vmem:[#allocation6 + $0x6f0] sm:$0xff]
        %v972 = vld [vmem:[#allocation6 + $0x6f8] sm:$0xff]
        %v973 = vld [vmem:[#allocation6 + $0x700] sm:$0xff]
        %v974 = vld [vmem:[#allocation6 + $0x708] sm:$0xff]
        %v975 = vld [vmem:[#allocation6 + $0x710] sm:$0xff]
        %v976 = vld [vmem:[#allocation6 + $0x718] sm:$0xff]
        %v977 = vld [vmem:[#allocation6 + $0x720] sm:$0xff]
        %v978 = vld [vmem:[#allocation6 + $0x728] sm:$0xff]
        %v979 = vld [vmem:[#allocation6 + $0x730] sm:$0xff]
        %v980 = vld [vmem:[#allocation6 + $0x738] sm:$0xff]
        %v981 = vld [vmem:[#allocation6 + $0x740] sm:$0xff]
        %v982 = vld [vmem:[#allocation6 + $0x748] sm:$0xff]
        %v983 = vld [vmem:[#allocation6 + $0x750] sm:$0xff]
        %v984 = vld [vmem:[#allocation6 + $0x758] sm:$0xff]
        %v985 = vld [vmem:[#allocation6 + $0x760] sm:$0xff]
        %v986 = vld [vmem:[#allocation6 + $0x768] sm:$0xff]
        %v987 = vld [vmem:[#allocation6 + $0x770] sm:$0xff]
        %v988 = vld [vmem:[#allocation6 + $0x778] sm:$0xff]
        %v989 = vld [vmem:[#allocation6 + $0x780] sm:$0xff]
        %v990 = vld [vmem:[#allocation6 + $0x788] sm:$0xff]
        %v991 = vld [vmem:[#allocation6 + $0x790] sm:$0xff]
        %v992 = vld [vmem:[#allocation6 + $0x798] sm:$0xff]
        %v993 = vld [vmem:[#allocation6 + $0x7a0] sm:$0xff]
        %v994 = vld [vmem:[#allocation6 + $0x7a8] sm:$0xff]
        %v995 = vld [vmem:[#allocation6 + $0x7b0] sm:$0xff]
        %v996 = vld [vmem:[#allocation6 + $0x7b8] sm:$0xff]
        %v997 = vld [vmem:[#allocation6 + $0x7c0] sm:$0xff]
        %v998 = vld [vmem:[#allocation6 + $0x7c8] sm:$0xff]
        %v999 = vld [vmem:[#allocation6 + $0x7d0] sm:$0xff]
        %v1000 = vld [vmem:[#allocation6 + $0x7d8] sm:$0xff]
        %v1001 = vld [vmem:[#allocation6 + $0x7e0] sm:$0xff]
        %v1002 = vld [vmem:[#allocation6 + $0x7e8] sm:$0xff]
        %v1003 = vld [vmem:[#allocation6 + $0x7f0] sm:$0xff]
        %v1004 = vld [vmem:[#allocation6 + $0x7f8] sm:$0xff]
        %v1005 = vld [vmem:[#allocation6 + $0x800] sm:$0xff]
        %v1006 = vld [vmem:[#allocation6 + $0x808] sm:$0xff]
        %v1007 = vld [vmem:[#allocation6 + $0x810] sm:$0xff]
        %v1008 = vld [vmem:[#allocation6 + $0x818] sm:$0xff]
        %v1009 = vld [vmem:[#allocation6 + $0x820] sm:$0xff]
        %v1010 = vld [vmem:[#allocation6 + $0x828] sm:$0xff]
        %v1011 = vld [vmem:[#allocation6 + $0x830] sm:$0xff]
        %v1012 = vld [vmem:[#allocation6 + $0x838] sm:$0xff]
        %v1013 = vld [vmem:[#allocation6 + $0x840] sm:$0xff]
        %v1014 = vld [vmem:[#allocation6 + $0x848] sm:$0xff]
        %v1015 = vld [vmem:[#allocation6 + $0x850] sm:$0xff]
        %v1016 = vld [vmem:[#allocation6 + $0x858] sm:$0xff]
        %v1017 = vld [vmem:[#allocation6 + $0x860] sm:$0xff]
        %v1018 = vld [vmem:[#allocation6 + $0x868] sm:$0xff]
        %v1019 = vld [vmem:[#allocation6 + $0x870] sm:$0xff]
        %v1020 = vld [vmem:[#allocation6 + $0x878] sm:$0xff]
        %v1021 = vld [vmem:[#allocation6 + $0x880] sm:$0xff]
        %v1022 = vld [vmem:[#allocation6 + $0x888] sm:$0xff]
        %v1023 = vld [vmem:[#allocation6 + $0x890] sm:$0xff]
        %v1024 = vld [vmem:[#allocation6 + $0x898] sm:$0xff]
        %v1025 = vld [vmem:[#allocation6 + $0x8a0] sm:$0xff]
        %v1026 = vld [vmem:[#allocation6 + $0x8a8] sm:$0xff]
        %v1027 = vld [vmem:[#allocation6 + $0x8b0] sm:$0xff]
        %v1028 = vld [vmem:[#allocation6 + $0x8b8] sm:$0xff]
        %v1029 = vld [vmem:[#allocation6 + $0x8c0] sm:$0xff]
        %v1030 = vld [vmem:[#allocation6 + $0x8c8] sm:$0xff]
        %v1031 = vld [vmem:[#allocation6 + $0x8d0] sm:$0xff]
        %v1032 = vld [vmem:[#allocation6 + $0x8d8] sm:$0xff]
        %v1033 = vld [vmem:[#allocation6 + $0x8e0] sm:$0xff]
        %v1034 = vld [vmem:[#allocation6 + $0x8e8] sm:$0xff]
        %v1035 = vld [vmem:[#allocation6 + $0x8f0] sm:$0xff]
        %v1036 = vld [vmem:[#allocation6 + $0x8f8] sm:$0xff]
        %v1037 = vld [vmem:[#allocation6 + $0x900] sm:$0xff]
        %v1038 = vld [vmem:[#allocation6 + $0x908] sm:$0xff]
        %v1039 = vld [vmem:[#allocation6 + $0x910] sm:$0xff]
        %v1040 = vld [vmem:[#allocation6 + $0x918] sm:$0xff]
        %v1041 = vld [vmem:[#allocation6 + $0x920] sm:$0xff]
        %v1042 = vld [vmem:[#allocation6 + $0x928] sm:$0xff]
        %v1043 = vld [vmem:[#allocation6 + $0x930] sm:$0xff]
        %v1044 = vld [vmem:[#allocation6 + $0x938] sm:$0xff]
        %v1045 = vld [vmem:[#allocation6 + $0x940] sm:$0xff]
        %v1046 = vld [vmem:[#allocation6 + $0x948] sm:$0xff]
        %v1047 = vld [vmem:[#allocation6 + $0x950] sm:$0xff]
        %v1048 = vld [vmem:[#allocation6 + $0x958] sm:$0xff]
        %v1049 = vld [vmem:[#allocation6 + $0x960] sm:$0xff]
        %v1050 = vld [vmem:[#allocation6 + $0x968] sm:$0xff]
        %v1051 = vld [vmem:[#allocation6 + $0x970] sm:$0xff]
        %v1052 = vld [vmem:[#allocation6 + $0x978] sm:$0xff]
        %v1053 = vld [vmem:[#allocation6 + $0x980] sm:$0xff]
        %v1054 = vld [vmem:[#allocation6 + $0x988] sm:$0xff]
        %v1055 = vld [vmem:[#allocation6 + $0x990] sm:$0xff]
        %v1056 = vld [vmem:[#allocation6 + $0x998] sm:$0xff]
        %v1057 = vld [vmem:[#allocation6 + $0x9a0] sm:$0xff]
        %v1058 = vld [vmem:[#allocation6 + $0x9a8] sm:$0xff]
        %v1059 = vld [vmem:[#allocation6 + $0x9b0] sm:$0xff]
        %v1060 = vld [vmem:[#allocation6 + $0x9b8] sm:$0xff]
        %v1061 = vld [vmem:[#allocation6 + $0x9c0] sm:$0xff]
        %v1062 = vld [vmem:[#allocation6 + $0x9c8] sm:$0xff]
        %v1063 = vld [vmem:[#allocation6 + $0x9d0] sm:$0xff]
        %v1064 = vld [vmem:[#allocation6 + $0x9d8] sm:$0xff]
        %v1065 = vld [vmem:[#allocation6 + $0x9e0] sm:$0xff]
        %v1066 = vld [vmem:[#allocation6 + $0x9e8] sm:$0xff]
        %v1067 = vld [vmem:[#allocation6 + $0x9f0] sm:$0xff]
        %v1068 = vld [vmem:[#allocation6 + $0x9f8] sm:$0xff]
        %v1069 = vld [vmem:[#allocation7] sm:$0xf]
        %v1071 = vlaneseq
        %v1072 = vshrl.u32 %v1071, 7
        %v1073 = vsub.s32 0, %v1072
        %v1074 = vrot.slane %v1069, %v1073
        %v1075 = vlaneseq
        %v1076 = vshrl.u32 %v1075, 7
        %v1077 = vsub.s32 1, %v1076
        %v1078 = vrot.slane %v1069, %v1077
        %v1079 = vlaneseq
        %v1080 = vshrl.u32 %v1079, 7
        %v1081 = vsub.s32 2, %v1080
        %v1082 = vrot.slane %v1069, %v1081
        %v1083 = vlaneseq
        %v1084 = vshrl.u32 %v1083, 7
        %v1085 = vsub.s32 3, %v1084
        %v1086 = vrot.slane %v1069, %v1085
        %v1411 = vunpack.c.l.b16 %v749
        %v1412 = vunpack.c.h.b16 %v749
        %v1413 = vunpack.c.l.b16 %v750
        %v1414 = vunpack.c.h.b16 %v750
        %v1415 = vunpack.c.l.b16 %v751
        %v1416 = vunpack.c.h.b16 %v751
        %v1417 = vunpack.c.l.b16 %v752
        %v1418 = vunpack.c.h.b16 %v752
        %v1419 = vunpack.c.l.b16 %v753
        %v1420 = vunpack.c.h.b16 %v753
        %v1421 = vunpack.c.l.b16 %v754
        %v1422 = vunpack.c.h.b16 %v754
        %v1423 = vunpack.c.l.b16 %v755
        %v1424 = vunpack.c.h.b16 %v755
        %v1425 = vunpack.c.l.b16 %v756
        %v1426 = vunpack.c.h.b16 %v756
        %v1427 = vunpack.c.l.b16 %v757
        %v1428 = vunpack.c.h.b16 %v757
        %v1429 = vunpack.c.l.b16 %v758
        %v1430 = vunpack.c.h.b16 %v758
        %v1431 = vunpack.c.l.b16 %v759
        %v1432 = vunpack.c.h.b16 %v759
        %v1433 = vunpack.c.l.b16 %v760
        %v1434 = vunpack.c.h.b16 %v760
        %v1435 = vunpack.c.l.b16 %v761
        %v1436 = vunpack.c.h.b16 %v761
        %v1437 = vunpack.c.l.b16 %v762
        %v1438 = vunpack.c.h.b16 %v762
        %v1439 = vunpack.c.l.b16 %v763
        %v1440 = vunpack.c.h.b16 %v763
        %v1441 = vunpack.c.l.b16 %v764
        %v1442 = vunpack.c.h.b16 %v764
        %v1443 = vunpack.c.l.b16 %v765
        %v1444 = vunpack.c.h.b16 %v765
        %v1445 = vunpack.c.l.b16 %v766
        %v1446 = vunpack.c.h.b16 %v766
        %v1447 = vunpack.c.l.b16 %v767
        %v1448 = vunpack.c.h.b16 %v767
        %v1449 = vunpack.c.l.b16 %v768
        %v1450 = vunpack.c.h.b16 %v768
        %v1451 = vunpack.c.l.b16 %v769
        %v1452 = vunpack.c.h.b16 %v769
        %v1453 = vunpack.c.l.b16 %v770
        %v1454 = vunpack.c.h.b16 %v770
        %v1455 = vunpack.c.l.b16 %v771
        %v1456 = vunpack.c.h.b16 %v771
        %v1457 = vunpack.c.l.b16 %v772
        %v1458 = vunpack.c.h.b16 %v772
        %v1459 = vunpack.c.l.b16 %v773
        %v1460 = vunpack.c.h.b16 %v773
        %v1461 = vunpack.c.l.b16 %v774
        %v1462 = vunpack.c.h.b16 %v774
        %v1463 = vunpack.c.l.b16 %v775
        %v1464 = vunpack.c.h.b16 %v775
        %v1465 = vunpack.c.l.b16 %v776
        %v1466 = vunpack.c.h.b16 %v776
        %v1467 = vunpack.c.l.b16 %v777
        %v1468 = vunpack.c.h.b16 %v777
        %v1469 = vunpack.c.l.b16 %v778
        %v1470 = vunpack.c.h.b16 %v778
        %v1471 = vunpack.c.l.b16 %v779
        %v1472 = vunpack.c.h.b16 %v779
        %v1473 = vunpack.c.l.b16 %v780
        %v1474 = vunpack.c.h.b16 %v780
        %v1475 = vunpack.c.l.b16 %v781
        %v1476 = vunpack.c.h.b16 %v781
        %v1477 = vunpack.c.l.b16 %v782
        %v1478 = vunpack.c.h.b16 %v782
        %v1479 = vunpack.c.l.b16 %v783
        %v1480 = vunpack.c.h.b16 %v783
        %v1481 = vunpack.c.l.b16 %v784
        %v1482 = vunpack.c.h.b16 %v784
        %v1483 = vunpack.c.l.b16 %v785
        %v1484 = vunpack.c.h.b16 %v785
        %v1485 = vunpack.c.l.b16 %v786
        %v1486 = vunpack.c.h.b16 %v786
        %v1487 = vunpack.c.l.b16 %v787
        %v1488 = vunpack.c.h.b16 %v787
        %v1489 = vunpack.c.l.b16 %v788
        %v1490 = vunpack.c.h.b16 %v788
        %v1491 = vunpack.c.l.b16 %v789
        %v1492 = vunpack.c.h.b16 %v789
        %v1493 = vunpack.c.l.b16 %v790
        %v1494 = vunpack.c.h.b16 %v790
        %v1495 = vunpack.c.l.b16 %v791
        %v1496 = vunpack.c.h.b16 %v791
        %v1497 = vunpack.c.l.b16 %v792
        %v1498 = vunpack.c.h.b16 %v792
        %v1499 = vunpack.c.l.b16 %v793
        %v1500 = vunpack.c.h.b16 %v793
        %v1501 = vunpack.c.l.b16 %v794
        %v1502 = vunpack.c.h.b16 %v794
        %v1503 = vunpack.c.l.b16 %v795
        %v1504 = vunpack.c.h.b16 %v795
        %v1505 = vunpack.c.l.b16 %v796
        %v1506 = vunpack.c.h.b16 %v796
        %v1507 = vunpack.c.l.b16 %v797
        %v1508 = vunpack.c.h.b16 %v797
        %v1509 = vunpack.c.l.b16 %v798
        %v1510 = vunpack.c.h.b16 %v798
        %v1511 = vunpack.c.l.b16 %v799
        %v1512 = vunpack.c.h.b16 %v799
        %v1513 = vunpack.c.l.b16 %v800
        %v1514 = vunpack.c.h.b16 %v800
        %v1515 = vunpack.c.l.b16 %v801
        %v1516 = vunpack.c.h.b16 %v801
        %v1517 = vunpack.c.l.b16 %v802
        %v1518 = vunpack.c.h.b16 %v802
        %v1519 = vunpack.c.l.b16 %v803
        %v1520 = vunpack.c.h.b16 %v803
        %v1521 = vunpack.c.l.b16 %v804
        %v1522 = vunpack.c.h.b16 %v804
        %v1523 = vunpack.c.l.b16 %v805
        %v1524 = vunpack.c.h.b16 %v805
        %v1525 = vunpack.c.l.b16 %v806
        %v1526 = vunpack.c.h.b16 %v806
        %v1527 = vunpack.c.l.b16 %v807
        %v1528 = vunpack.c.h.b16 %v807
        %v1529 = vunpack.c.l.b16 %v808
        %v1530 = vunpack.c.h.b16 %v808
        %v1531 = vunpack.c.l.b16 %v809
        %v1532 = vunpack.c.h.b16 %v809
        %v1533 = vunpack.c.l.b16 %v810
        %v1534 = vunpack.c.h.b16 %v810
        %v1535 = vunpack.c.l.b16 %v811
        %v1536 = vunpack.c.h.b16 %v811
        %v1537 = vunpack.c.l.b16 %v812
        %v1538 = vunpack.c.h.b16 %v812
        %v1539 = vunpack.c.l.b16 %v813
        %v1540 = vunpack.c.h.b16 %v813
        %v1541 = vunpack.c.l.b16 %v814
        %v1542 = vunpack.c.h.b16 %v814
        %v1543 = vunpack.c.l.b16 %v815
        %v1544 = vunpack.c.h.b16 %v815
        %v1545 = vunpack.c.l.b16 %v816
        %v1546 = vunpack.c.h.b16 %v816
        %v1547 = vunpack.c.l.b16 %v817
        %v1548 = vunpack.c.h.b16 %v817
        %v1549 = vunpack.c.l.b16 %v818
        %v1550 = vunpack.c.h.b16 %v818
        %v1551 = vunpack.c.l.b16 %v819
        %v1552 = vunpack.c.h.b16 %v819
        %v1553 = vunpack.c.l.b16 %v820
        %v1554 = vunpack.c.h.b16 %v820
        %v1555 = vunpack.c.l.b16 %v821
        %v1556 = vunpack.c.h.b16 %v821
        %v1557 = vunpack.c.l.b16 %v822
        %v1558 = vunpack.c.h.b16 %v822
        %v1559 = vunpack.c.l.b16 %v823
        %v1560 = vunpack.c.h.b16 %v823
        %v1561 = vunpack.c.l.b16 %v824
        %v1562 = vunpack.c.h.b16 %v824
        %v1563 = vunpack.c.l.b16 %v825
        %v1564 = vunpack.c.h.b16 %v825
        %v1565 = vunpack.c.l.b16 %v826
        %v1566 = vunpack.c.h.b16 %v826
        %v1567 = vunpack.c.l.b16 %v827
        %v1568 = vunpack.c.h.b16 %v827
        %v1569 = vunpack.c.l.b16 %v828
        %v1570 = vunpack.c.h.b16 %v828
        %v1571 = vunpack.c.l.b16 %v829
        %v1572 = vunpack.c.h.b16 %v829
        %v1573 = vunpack.c.l.b16 %v830
        %v1574 = vunpack.c.h.b16 %v830
        %v1575 = vunpack.c.l.b16 %v831
        %v1576 = vunpack.c.h.b16 %v831
        %v1577 = vunpack.c.l.b16 %v832
        %v1578 = vunpack.c.h.b16 %v832
        %v1579 = vunpack.c.l.b16 %v833
        %v1580 = vunpack.c.h.b16 %v833
        %v1581 = vunpack.c.l.b16 %v834
        %v1582 = vunpack.c.h.b16 %v834
        %v1583 = vunpack.c.l.b16 %v835
        %v1584 = vunpack.c.h.b16 %v835
        %v1585 = vunpack.c.l.b16 %v836
        %v1586 = vunpack.c.h.b16 %v836
        %v1587 = vunpack.c.l.b16 %v837
        %v1588 = vunpack.c.h.b16 %v837
        %v1589 = vunpack.c.l.b16 %v838
        %v1590 = vunpack.c.h.b16 %v838
        %v1591 = vunpack.c.l.b16 %v839
        %v1592 = vunpack.c.h.b16 %v839
        %v1593 = vunpack.c.l.b16 %v840
        %v1594 = vunpack.c.h.b16 %v840
        %v1595 = vunpack.c.l.b16 %v841
        %v1596 = vunpack.c.h.b16 %v841
        %v1597 = vunpack.c.l.b16 %v842
        %v1598 = vunpack.c.h.b16 %v842
        %v1599 = vunpack.c.l.b16 %v843
        %v1600 = vunpack.c.h.b16 %v843
        %v1601 = vunpack.c.l.b16 %v844
        %v1602 = vunpack.c.h.b16 %v844
        %v1603 = vunpack.c.l.b16 %v845
        %v1604 = vunpack.c.h.b16 %v845
        %v1605 = vunpack.c.l.b16 %v846
        %v1606 = vunpack.c.h.b16 %v846
        %v1607 = vunpack.c.l.b16 %v847
        %v1608 = vunpack.c.h.b16 %v847
        %v1609 = vunpack.c.l.b16 %v848
        %v1610 = vunpack.c.h.b16 %v848
        %v1611 = vunpack.c.l.b16 %v849
        %v1612 = vunpack.c.h.b16 %v849
        %v1613 = vunpack.c.l.b16 %v850
        %v1614 = vunpack.c.h.b16 %v850
        %v1615 = vunpack.c.l.b16 %v851
        %v1616 = vunpack.c.h.b16 %v851
        %v1617 = vunpack.c.l.b16 %v852
        %v1618 = vunpack.c.h.b16 %v852
        %v1619 = vunpack.c.l.b16 %v853
        %v1620 = vunpack.c.h.b16 %v853
        %v1621 = vunpack.c.l.b16 %v854
        %v1622 = vunpack.c.h.b16 %v854
        %v1623 = vunpack.c.l.b16 %v855
        %v1624 = vunpack.c.h.b16 %v855
        %v1625 = vunpack.c.l.b16 %v856
        %v1626 = vunpack.c.h.b16 %v856
        %v1627 = vunpack.c.l.b16 %v857
        %v1628 = vunpack.c.h.b16 %v857
        %v1629 = vunpack.c.l.b16 %v858
        %v1630 = vunpack.c.h.b16 %v858
        %v1631 = vunpack.c.l.b16 %v859
        %v1632 = vunpack.c.h.b16 %v859
        %v1633 = vunpack.c.l.b16 %v860
        %v1634 = vunpack.c.h.b16 %v860
        %v1635 = vunpack.c.l.b16 %v861
        %v1636 = vunpack.c.h.b16 %v861
        %v1637 = vunpack.c.l.b16 %v862
        %v1638 = vunpack.c.h.b16 %v862
        %v1639 = vunpack.c.l.b16 %v863
        %v1640 = vunpack.c.h.b16 %v863
        %v1641 = vunpack.c.l.b16 %v864
        %v1642 = vunpack.c.h.b16 %v864
        %v1643 = vunpack.c.l.b16 %v865
        %v1644 = vunpack.c.h.b16 %v865
        %v1645 = vunpack.c.l.b16 %v866
        %v1646 = vunpack.c.h.b16 %v866
        %v1647 = vunpack.c.l.b16 %v867
        %v1648 = vunpack.c.h.b16 %v867
        %v1649 = vunpack.c.l.b16 %v868
        %v1650 = vunpack.c.h.b16 %v868
        %v1651 = vunpack.c.l.b16 %v869
        %v1652 = vunpack.c.h.b16 %v869
        %v1653 = vunpack.c.l.b16 %v870
        %v1654 = vunpack.c.h.b16 %v870
        %v1655 = vunpack.c.l.b16 %v871
        %v1656 = vunpack.c.h.b16 %v871
        %v1657 = vunpack.c.l.b16 %v872
        %v1658 = vunpack.c.h.b16 %v872
        %v1659 = vunpack.c.l.b16 %v873
        %v1660 = vunpack.c.h.b16 %v873
        %v1661 = vunpack.c.l.b16 %v874
        %v1662 = vunpack.c.h.b16 %v874
        %v1663 = vunpack.c.l.b16 %v875
        %v1664 = vunpack.c.h.b16 %v875
        %v1665 = vunpack.c.l.b16 %v876
        %v1666 = vunpack.c.h.b16 %v876
        %v1667 = vunpack.c.l.b16 %v877
        %v1668 = vunpack.c.h.b16 %v877
        %v1669 = vunpack.c.l.b16 %v878
        %v1670 = vunpack.c.h.b16 %v878
        %v1671 = vunpack.c.l.b16 %v879
        %v1672 = vunpack.c.h.b16 %v879
        %v1673 = vunpack.c.l.b16 %v880
        %v1674 = vunpack.c.h.b16 %v880
        %v1675 = vunpack.c.l.b16 %v881
        %v1676 = vunpack.c.h.b16 %v881
        %v1677 = vunpack.c.l.b16 %v882
        %v1678 = vunpack.c.h.b16 %v882
        %v1679 = vunpack.c.l.b16 %v883
        %v1680 = vunpack.c.h.b16 %v883
        %v1681 = vunpack.c.l.b16 %v884
        %v1682 = vunpack.c.h.b16 %v884
        %v1683 = vunpack.c.l.b16 %v885
        %v1684 = vunpack.c.h.b16 %v885
        %v1685 = vunpack.c.l.b16 %v886
        %v1686 = vunpack.c.h.b16 %v886
        %v1687 = vunpack.c.l.b16 %v887
        %v1688 = vunpack.c.h.b16 %v887
        %v1689 = vunpack.c.l.b16 %v888
        %v1690 = vunpack.c.h.b16 %v888
        %v1691 = vunpack.c.l.b16 %v889
        %v1692 = vunpack.c.h.b16 %v889
        %v1693 = vunpack.c.l.b16 %v890
        %v1694 = vunpack.c.h.b16 %v890
        %v1695 = vunpack.c.l.b16 %v891
        %v1696 = vunpack.c.h.b16 %v891
        %v1697 = vunpack.c.l.b16 %v892
        %v1698 = vunpack.c.h.b16 %v892
        %v1699 = vunpack.c.l.b16 %v893
        %v1700 = vunpack.c.h.b16 %v893
        %v1701 = vunpack.c.l.b16 %v894
        %v1702 = vunpack.c.h.b16 %v894
        %v1703 = vunpack.c.l.b16 %v895
        %v1704 = vunpack.c.h.b16 %v895
        %v1705 = vunpack.c.l.b16 %v896
        %v1706 = vunpack.c.h.b16 %v896
        %v1707 = vunpack.c.l.b16 %v897
        %v1708 = vunpack.c.h.b16 %v897
        %v1709 = vunpack.c.l.b16 %v898
        %v1710 = vunpack.c.h.b16 %v898
        %v1711 = vunpack.c.l.b16 %v899
        %v1712 = vunpack.c.h.b16 %v899
        %v1713 = vunpack.c.l.b16 %v900
        %v1714 = vunpack.c.h.b16 %v900
        %v1715 = vunpack.c.l.b16 %v901
        %v1716 = vunpack.c.h.b16 %v901
        %v1717 = vunpack.c.l.b16 %v902
        %v1718 = vunpack.c.h.b16 %v902
        %v1719 = vunpack.c.l.b16 %v903
        %v1720 = vunpack.c.h.b16 %v903
        %v1721 = vunpack.c.l.b16 %v904
        %v1722 = vunpack.c.h.b16 %v904
        %v1723 = vunpack.c.l.b16 %v905
        %v1724 = vunpack.c.h.b16 %v905
        %v1725 = vunpack.c.l.b16 %v906
        %v1726 = vunpack.c.h.b16 %v906
        %v1727 = vunpack.c.l.b16 %v907
        %v1728 = vunpack.c.h.b16 %v907
        %v1729 = vunpack.c.l.b16 %v908
        %v1730 = vunpack.c.h.b16 %v908
        %v1731 = vunpack.c.l.b16 %v909
        %v1732 = vunpack.c.h.b16 %v909
        %v1733 = vunpack.c.l.b16 %v910
        %v1734 = vunpack.c.h.b16 %v910
        %v1735 = vunpack.c.l.b16 %v911
        %v1736 = vunpack.c.h.b16 %v911
        %v1737 = vunpack.c.l.b16 %v912
        %v1738 = vunpack.c.h.b16 %v912
        %v1739 = vunpack.c.l.b16 %v913
        %v1740 = vunpack.c.h.b16 %v913
        %v1741 = vunpack.c.l.b16 %v914
        %v1742 = vunpack.c.h.b16 %v914
        %v1743 = vunpack.c.l.b16 %v915
        %v1744 = vunpack.c.h.b16 %v915
        %v1745 = vunpack.c.l.b16 %v916
        %v1746 = vunpack.c.h.b16 %v916
        %v1747 = vunpack.c.l.b16 %v917
        %v1748 = vunpack.c.h.b16 %v917
        %v1749 = vunpack.c.l.b16 %v918
        %v1750 = vunpack.c.h.b16 %v918
        %v1751 = vunpack.c.l.b16 %v919
        %v1752 = vunpack.c.h.b16 %v919
        %v1753 = vunpack.c.l.b16 %v920
        %v1754 = vunpack.c.h.b16 %v920
        %v1755 = vunpack.c.l.b16 %v921
        %v1756 = vunpack.c.h.b16 %v921
        %v1757 = vunpack.c.l.b16 %v922
        %v1758 = vunpack.c.h.b16 %v922
        %v1759 = vunpack.c.l.b16 %v923
        %v1760 = vunpack.c.h.b16 %v923
        %v1761 = vunpack.c.l.b16 %v924
        %v1762 = vunpack.c.h.b16 %v924
        %v1763 = vunpack.c.l.b16 %v925
        %v1764 = vunpack.c.h.b16 %v925
        %v1765 = vunpack.c.l.b16 %v926
        %v1766 = vunpack.c.h.b16 %v926
        %v1767 = vunpack.c.l.b16 %v927
        %v1768 = vunpack.c.h.b16 %v927
        %v1769 = vunpack.c.l.b16 %v928
        %v1770 = vunpack.c.h.b16 %v928
        %v1771 = vunpack.c.l.b16 %v929
        %v1772 = vunpack.c.h.b16 %v929
        %v1773 = vunpack.c.l.b16 %v930
        %v1774 = vunpack.c.h.b16 %v930
        %v1775 = vunpack.c.l.b16 %v931
        %v1776 = vunpack.c.h.b16 %v931
        %v1777 = vunpack.c.l.b16 %v932
        %v1778 = vunpack.c.h.b16 %v932
        %v1779 = vunpack.c.l.b16 %v933
        %v1780 = vunpack.c.h.b16 %v933
        %v1781 = vunpack.c.l.b16 %v934
        %v1782 = vunpack.c.h.b16 %v934
        %v1783 = vunpack.c.l.b16 %v935
        %v1784 = vunpack.c.h.b16 %v935
        %v1785 = vunpack.c.l.b16 %v936
        %v1786 = vunpack.c.h.b16 %v936
        %v1787 = vunpack.c.l.b16 %v937
        %v1788 = vunpack.c.h.b16 %v937
        %v1789 = vunpack.c.l.b16 %v938
        %v1790 = vunpack.c.h.b16 %v938
        %v1791 = vunpack.c.l.b16 %v939
        %v1792 = vunpack.c.h.b16 %v939
        %v1793 = vunpack.c.l.b16 %v940
        %v1794 = vunpack.c.h.b16 %v940
        %v1795 = vunpack.c.l.b16 %v941
        %v1796 = vunpack.c.h.b16 %v941
        %v1797 = vunpack.c.l.b16 %v942
        %v1798 = vunpack.c.h.b16 %v942
        %v1799 = vunpack.c.l.b16 %v943
        %v1800 = vunpack.c.h.b16 %v943
        %v1801 = vunpack.c.l.b16 %v944
        %v1802 = vunpack.c.h.b16 %v944
        %v1803 = vunpack.c.l.b16 %v945
        %v1804 = vunpack.c.h.b16 %v945
        %v1805 = vunpack.c.l.b16 %v946
        %v1806 = vunpack.c.h.b16 %v946
        %v1807 = vunpack.c.l.b16 %v947
        %v1808 = vunpack.c.h.b16 %v947
        %v1809 = vunpack.c.l.b16 %v948
        %v1810 = vunpack.c.h.b16 %v948
        %v1811 = vunpack.c.l.b16 %v949
        %v1812 = vunpack.c.h.b16 %v949
        %v1813 = vunpack.c.l.b16 %v950
        %v1814 = vunpack.c.h.b16 %v950
        %v1815 = vunpack.c.l.b16 %v951
        %v1816 = vunpack.c.h.b16 %v951
        %v1817 = vunpack.c.l.b16 %v952
        %v1818 = vunpack.c.h.b16 %v952
        %v1819 = vunpack.c.l.b16 %v953
        %v1820 = vunpack.c.h.b16 %v953
        %v1821 = vunpack.c.l.b16 %v954
        %v1822 = vunpack.c.h.b16 %v954
        %v1823 = vunpack.c.l.b16 %v955
        %v1824 = vunpack.c.h.b16 %v955
        %v1825 = vunpack.c.l.b16 %v956
        %v1826 = vunpack.c.h.b16 %v956
        %v1827 = vunpack.c.l.b16 %v957
        %v1828 = vunpack.c.h.b16 %v957
        %v1829 = vunpack.c.l.b16 %v958
        %v1830 = vunpack.c.h.b16 %v958
        %v1831 = vunpack.c.l.b16 %v959
        %v1832 = vunpack.c.h.b16 %v959
        %v1833 = vunpack.c.l.b16 %v960
        %v1834 = vunpack.c.h.b16 %v960
        %v1835 = vunpack.c.l.b16 %v961
        %v1836 = vunpack.c.h.b16 %v961
        %v1837 = vunpack.c.l.b16 %v962
        %v1838 = vunpack.c.h.b16 %v962
        %v1839 = vunpack.c.l.b16 %v963
        %v1840 = vunpack.c.h.b16 %v963
        %v1841 = vunpack.c.l.b16 %v964
        %v1842 = vunpack.c.h.b16 %v964
        %v1843 = vunpack.c.l.b16 %v965
        %v1844 = vunpack.c.h.b16 %v965
        %v1845 = vunpack.c.l.b16 %v966
        %v1846 = vunpack.c.h.b16 %v966
        %v1847 = vunpack.c.l.b16 %v967
        %v1848 = vunpack.c.h.b16 %v967
        %v1849 = vunpack.c.l.b16 %v968
        %v1850 = vunpack.c.h.b16 %v968
        %v1851 = vunpack.c.l.b16 %v969
        %v1852 = vunpack.c.h.b16 %v969
        %v1853 = vunpack.c.l.b16 %v970
        %v1854 = vunpack.c.h.b16 %v970
        %v1855 = vunpack.c.l.b16 %v971
        %v1856 = vunpack.c.h.b16 %v971
        %v1857 = vunpack.c.l.b16 %v972
        %v1858 = vunpack.c.h.b16 %v972
        %v1859 = vunpack.c.l.b16 %v973
        %v1860 = vunpack.c.h.b16 %v973
        %v1861 = vunpack.c.l.b16 %v974
        %v1862 = vunpack.c.h.b16 %v974
        %v1863 = vunpack.c.l.b16 %v975
        %v1864 = vunpack.c.h.b16 %v975
        %v1865 = vunpack.c.l.b16 %v976
        %v1866 = vunpack.c.h.b16 %v976
        %v1867 = vunpack.c.l.b16 %v977
        %v1868 = vunpack.c.h.b16 %v977
        %v1869 = vunpack.c.l.b16 %v978
        %v1870 = vunpack.c.h.b16 %v978
        %v1871 = vunpack.c.l.b16 %v979
        %v1872 = vunpack.c.h.b16 %v979
        %v1873 = vunpack.c.l.b16 %v980
        %v1874 = vunpack.c.h.b16 %v980
        %v1875 = vunpack.c.l.b16 %v981
        %v1876 = vunpack.c.h.b16 %v981
        %v1877 = vunpack.c.l.b16 %v982
        %v1878 = vunpack.c.h.b16 %v982
        %v1879 = vunpack.c.l.b16 %v983
        %v1880 = vunpack.c.h.b16 %v983
        %v1881 = vunpack.c.l.b16 %v984
        %v1882 = vunpack.c.h.b16 %v984
        %v1883 = vunpack.c.l.b16 %v985
        %v1884 = vunpack.c.h.b16 %v985
        %v1885 = vunpack.c.l.b16 %v986
        %v1886 = vunpack.c.h.b16 %v986
        %v1887 = vunpack.c.l.b16 %v987
        %v1888 = vunpack.c.h.b16 %v987
        %v1889 = vunpack.c.l.b16 %v988
        %v1890 = vunpack.c.h.b16 %v988
        %v1891 = vunpack.c.l.b16 %v989
        %v1892 = vunpack.c.h.b16 %v989
        %v1893 = vunpack.c.l.b16 %v990
        %v1894 = vunpack.c.h.b16 %v990
        %v1895 = vunpack.c.l.b16 %v991
        %v1896 = vunpack.c.h.b16 %v991
        %v1897 = vunpack.c.l.b16 %v992
        %v1898 = vunpack.c.h.b16 %v992
        %v1899 = vunpack.c.l.b16 %v993
        %v1900 = vunpack.c.h.b16 %v993
        %v1901 = vunpack.c.l.b16 %v994
        %v1902 = vunpack.c.h.b16 %v994
        %v1903 = vunpack.c.l.b16 %v995
        %v1904 = vunpack.c.h.b16 %v995
        %v1905 = vunpack.c.l.b16 %v996
        %v1906 = vunpack.c.h.b16 %v996
        %v1907 = vunpack.c.l.b16 %v997
        %v1908 = vunpack.c.h.b16 %v997
        %v1909 = vunpack.c.l.b16 %v998
        %v1910 = vunpack.c.h.b16 %v998
        %v1911 = vunpack.c.l.b16 %v999
        %v1912 = vunpack.c.h.b16 %v999
        %v1913 = vunpack.c.l.b16 %v1000
        %v1914 = vunpack.c.h.b16 %v1000
        %v1915 = vunpack.c.l.b16 %v1001
        %v1916 = vunpack.c.h.b16 %v1001
        %v1917 = vunpack.c.l.b16 %v1002
        %v1918 = vunpack.c.h.b16 %v1002
        %v1919 = vunpack.c.l.b16 %v1003
        %v1920 = vunpack.c.h.b16 %v1003
        %v1921 = vunpack.c.l.b16 %v1004
        %v1922 = vunpack.c.h.b16 %v1004
        %v1923 = vunpack.c.l.b16 %v1005
        %v1924 = vunpack.c.h.b16 %v1005
        %v1925 = vunpack.c.l.b16 %v1006
        %v1926 = vunpack.c.h.b16 %v1006
        %v1927 = vunpack.c.l.b16 %v1007
        %v1928 = vunpack.c.h.b16 %v1007
        %v1929 = vunpack.c.l.b16 %v1008
        %v1930 = vunpack.c.h.b16 %v1008
        %v1931 = vunpack.c.l.b16 %v1009
        %v1932 = vunpack.c.h.b16 %v1009
        %v1933 = vunpack.c.l.b16 %v1010
        %v1934 = vunpack.c.h.b16 %v1010
        %v1935 = vunpack.c.l.b16 %v1011
        %v1936 = vunpack.c.h.b16 %v1011
        %v1937 = vunpack.c.l.b16 %v1012
        %v1938 = vunpack.c.h.b16 %v1012
        %v1939 = vunpack.c.l.b16 %v1013
        %v1940 = vunpack.c.h.b16 %v1013
        %v1941 = vunpack.c.l.b16 %v1014
        %v1942 = vunpack.c.h.b16 %v1014
        %v1943 = vunpack.c.l.b16 %v1015
        %v1944 = vunpack.c.h.b16 %v1015
        %v1945 = vunpack.c.l.b16 %v1016
        %v1946 = vunpack.c.h.b16 %v1016
        %v1947 = vunpack.c.l.b16 %v1017
        %v1948 = vunpack.c.h.b16 %v1017
        %v1949 = vunpack.c.l.b16 %v1018
        %v1950 = vunpack.c.h.b16 %v1018
        %v1951 = vunpack.c.l.b16 %v1019
        %v1952 = vunpack.c.h.b16 %v1019
        %v1953 = vunpack.c.l.b16 %v1020
        %v1954 = vunpack.c.h.b16 %v1020
        %v1955 = vunpack.c.l.b16 %v1021
        %v1956 = vunpack.c.h.b16 %v1021
        %v1957 = vunpack.c.l.b16 %v1022
        %v1958 = vunpack.c.h.b16 %v1022
        %v1959 = vunpack.c.l.b16 %v1023
        %v1960 = vunpack.c.h.b16 %v1023
        %v1961 = vunpack.c.l.b16 %v1024
        %v1962 = vunpack.c.h.b16 %v1024
        %v1963 = vunpack.c.l.b16 %v1025
        %v1964 = vunpack.c.h.b16 %v1025
        %v1965 = vunpack.c.l.b16 %v1026
        %v1966 = vunpack.c.h.b16 %v1026
        %v1967 = vunpack.c.l.b16 %v1027
        %v1968 = vunpack.c.h.b16 %v1027
        %v1969 = vunpack.c.l.b16 %v1028
        %v1970 = vunpack.c.h.b16 %v1028
        %v1971 = vunpack.c.l.b16 %v1029
        %v1972 = vunpack.c.h.b16 %v1029
        %v1973 = vunpack.c.l.b16 %v1030
        %v1974 = vunpack.c.h.b16 %v1030
        %v1975 = vunpack.c.l.b16 %v1031
        %v1976 = vunpack.c.h.b16 %v1031
        %v1977 = vunpack.c.l.b16 %v1032
        %v1978 = vunpack.c.h.b16 %v1032
        %v1979 = vunpack.c.l.b16 %v1033
        %v1980 = vunpack.c.h.b16 %v1033
        %v1981 = vunpack.c.l.b16 %v1034
        %v1982 = vunpack.c.h.b16 %v1034
        %v1983 = vunpack.c.l.b16 %v1035
        %v1984 = vunpack.c.h.b16 %v1035
        %v1985 = vunpack.c.l.b16 %v1036
        %v1986 = vunpack.c.h.b16 %v1036
        %v1987 = vunpack.c.l.b16 %v1037
        %v1988 = vunpack.c.h.b16 %v1037
        %v1989 = vunpack.c.l.b16 %v1038
        %v1990 = vunpack.c.h.b16 %v1038
        %v1991 = vunpack.c.l.b16 %v1039
        %v1992 = vunpack.c.h.b16 %v1039
        %v1993 = vunpack.c.l.b16 %v1040
        %v1994 = vunpack.c.h.b16 %v1040
        %v1995 = vunpack.c.l.b16 %v1041
        %v1996 = vunpack.c.h.b16 %v1041
        %v1997 = vunpack.c.l.b16 %v1042
        %v1998 = vunpack.c.h.b16 %v1042
        %v1999 = vunpack.c.l.b16 %v1043
        %v2000 = vunpack.c.h.b16 %v1043
        %v2001 = vunpack.c.l.b16 %v1044
        %v2002 = vunpack.c.h.b16 %v1044
        %v2003 = vunpack.c.l.b16 %v1045
        %v2004 = vunpack.c.h.b16 %v1045
        %v2005 = vunpack.c.l.b16 %v1046
        %v2006 = vunpack.c.h.b16 %v1046
        %v2007 = vunpack.c.l.b16 %v1047
        %v2008 = vunpack.c.h.b16 %v1047
        %v2009 = vunpack.c.l.b16 %v1048
        %v2010 = vunpack.c.h.b16 %v1048
        %v2011 = vunpack.c.l.b16 %v1049
        %v2012 = vunpack.c.h.b16 %v1049
        %v2013 = vunpack.c.l.b16 %v1050
        %v2014 = vunpack.c.h.b16 %v1050
        %v2015 = vunpack.c.l.b16 %v1051
        %v2016 = vunpack.c.h.b16 %v1051
        %v2017 = vunpack.c.l.b16 %v1052
        %v2018 = vunpack.c.h.b16 %v1052
        %v2019 = vunpack.c.l.b16 %v1053
        %v2020 = vunpack.c.h.b16 %v1053
        %v2021 = vunpack.c.l.b16 %v1054
        %v2022 = vunpack.c.h.b16 %v1054
        %v2023 = vunpack.c.l.b16 %v1055
        %v2024 = vunpack.c.h.b16 %v1055
        %v2025 = vunpack.c.l.b16 %v1056
        %v2026 = vunpack.c.h.b16 %v1056
        %v2027 = vunpack.c.l.b16 %v1057
        %v2028 = vunpack.c.h.b16 %v1057
        %v2029 = vunpack.c.l.b16 %v1058
        %v2030 = vunpack.c.h.b16 %v1058
        %v2031 = vunpack.c.l.b16 %v1059
        %v2032 = vunpack.c.h.b16 %v1059
        %v2033 = vunpack.c.l.b16 %v1060
        %v2034 = vunpack.c.h.b16 %v1060
        %v2035 = vunpack.c.l.b16 %v1061
        %v2036 = vunpack.c.h.b16 %v1061
        %v2037 = vunpack.c.l.b16 %v1062
        %v2038 = vunpack.c.h.b16 %v1062
        %v2039 = vunpack.c.l.b16 %v1063
        %v2040 = vunpack.c.h.b16 %v1063
        %v2041 = vunpack.c.l.b16 %v1064
        %v2042 = vunpack.c.h.b16 %v1064
        %v2043 = vunpack.c.l.b16 %v1065
        %v2044 = vunpack.c.h.b16 %v1065
        %v2045 = vunpack.c.l.b16 %v1066
        %v2046 = vunpack.c.h.b16 %v1066
        %v2047 = vunpack.c.l.b16 %v1067
        %v2048 = vunpack.c.h.b16 %v1067
        %v2049 = vunpack.c.l.b16 %v1068
        %v2050 = vunpack.c.h.b16 %v1068
        %v2051 = vpack.c.b16 %v1415, %v1411
        %v2052 = vpack.c.b16 %v1416, %v1412
        %v2053 = vpack.c.b16 %v1417, %v1413
        %v2054 = vpack.c.b16 %v1418, %v1414
        %v2055 = vpack.c.b16 %v1423, %v1419
        %v2056 = vpack.c.b16 %v1424, %v1420
        %v2057 = vpack.c.b16 %v1425, %v1421
        %v2058 = vpack.c.b16 %v1426, %v1422
        %v2059 = vpack.c.b16 %v1431, %v1427
        %v2060 = vpack.c.b16 %v1432, %v1428
        %v2061 = vpack.c.b16 %v1433, %v1429
        %v2062 = vpack.c.b16 %v1434, %v1430
        %v2063 = vpack.c.b16 %v1439, %v1435
        %v2064 = vpack.c.b16 %v1440, %v1436
        %v2065 = vpack.c.b16 %v1441, %v1437
        %v2066 = vpack.c.b16 %v1442, %v1438
        %v2067 = vpack.c.b16 %v1447, %v1443
        %v2068 = vpack.c.b16 %v1448, %v1444
        %v2069 = vpack.c.b16 %v1449, %v1445
        %v2070 = vpack.c.b16 %v1450, %v1446
        %v2071 = vpack.c.b16 %v1455, %v1451
        %v2072 = vpack.c.b16 %v1456, %v1452
        %v2073 = vpack.c.b16 %v1457, %v1453
        %v2074 = vpack.c.b16 %v1458, %v1454
        %v2075 = vpack.c.b16 %v1463, %v1459
        %v2076 = vpack.c.b16 %v1464, %v1460
        %v2077 = vpack.c.b16 %v1465, %v1461
        %v2078 = vpack.c.b16 %v1466, %v1462
        %v2079 = vpack.c.b16 %v1471, %v1467
        %v2080 = vpack.c.b16 %v1472, %v1468
        %v2081 = vpack.c.b16 %v1473, %v1469
        %v2082 = vpack.c.b16 %v1474, %v1470
        %v2083 = vpack.c.b16 %v1479, %v1475
        %v2084 = vpack.c.b16 %v1480, %v1476
        %v2085 = vpack.c.b16 %v1481, %v1477
        %v2086 = vpack.c.b16 %v1482, %v1478
        %v2087 = vpack.c.b16 %v1487, %v1483
        %v2088 = vpack.c.b16 %v1488, %v1484
        %v2089 = vpack.c.b16 %v1489, %v1485
        %v2090 = vpack.c.b16 %v1490, %v1486
        %v2091 = vpack.c.b16 %v1495, %v1491
        %v2092 = vpack.c.b16 %v1496, %v1492
        %v2093 = vpack.c.b16 %v1497, %v1493
        %v2094 = vpack.c.b16 %v1498, %v1494
        %v2095 = vpack.c.b16 %v1503, %v1499
        %v2096 = vpack.c.b16 %v1504, %v1500
        %v2097 = vpack.c.b16 %v1505, %v1501
        %v2098 = vpack.c.b16 %v1506, %v1502
        %v2099 = vpack.c.b16 %v1511, %v1507
        %v2100 = vpack.c.b16 %v1512, %v1508
        %v2101 = vpack.c.b16 %v1513, %v1509
        %v2102 = vpack.c.b16 %v1514, %v1510
        %v2103 = vpack.c.b16 %v1519, %v1515
        %v2104 = vpack.c.b16 %v1520, %v1516
        %v2105 = vpack.c.b16 %v1521, %v1517
        %v2106 = vpack.c.b16 %v1522, %v1518
        %v2107 = vpack.c.b16 %v1527, %v1523
        %v2108 = vpack.c.b16 %v1528, %v1524
        %v2109 = vpack.c.b16 %v1529, %v1525
        %v2110 = vpack.c.b16 %v1530, %v1526
        %v2111 = vpack.c.b16 %v1535, %v1531
        %v2112 = vpack.c.b16 %v1536, %v1532
        %v2113 = vpack.c.b16 %v1537, %v1533
        %v2114 = vpack.c.b16 %v1538, %v1534
        %v2115 = vpack.c.b16 %v1543, %v1539
        %v2116 = vpack.c.b16 %v1544, %v1540
        %v2117 = vpack.c.b16 %v1545, %v1541
        %v2118 = vpack.c.b16 %v1546, %v1542
        %v2119 = vpack.c.b16 %v1551, %v1547
        %v2120 = vpack.c.b16 %v1552, %v1548
        %v2121 = vpack.c.b16 %v1553, %v1549
        %v2122 = vpack.c.b16 %v1554, %v1550
        %v2123 = vpack.c.b16 %v1559, %v1555
        %v2124 = vpack.c.b16 %v1560, %v1556
        %v2125 = vpack.c.b16 %v1561, %v1557
        %v2126 = vpack.c.b16 %v1562, %v1558
        %v2127 = vpack.c.b16 %v1567, %v1563
        %v2128 = vpack.c.b16 %v1568, %v1564
        %v2129 = vpack.c.b16 %v1569, %v1565
        %v2130 = vpack.c.b16 %v1570, %v1566
        %v2131 = vpack.c.b16 %v1575, %v1571
        %v2132 = vpack.c.b16 %v1576, %v1572
        %v2133 = vpack.c.b16 %v1577, %v1573
        %v2134 = vpack.c.b16 %v1578, %v1574
        %v2135 = vpack.c.b16 %v1583, %v1579
        %v2136 = vpack.c.b16 %v1584, %v1580
        %v2137 = vpack.c.b16 %v1585, %v1581
        %v2138 = vpack.c.b16 %v1586, %v1582
        %v2139 = vpack.c.b16 %v1591, %v1587
        %v2140 = vpack.c.b16 %v1592, %v1588
        %v2141 = vpack.c.b16 %v1593, %v1589
        %v2142 = vpack.c.b16 %v1594, %v1590
        %v2143 = vpack.c.b16 %v1599, %v1595
        %v2144 = vpack.c.b16 %v1600, %v1596
        %v2145 = vpack.c.b16 %v1601, %v1597
        %v2146 = vpack.c.b16 %v1602, %v1598
        %v2147 = vpack.c.b16 %v1607, %v1603
        %v2148 = vpack.c.b16 %v1608, %v1604
        %v2149 = vpack.c.b16 %v1609, %v1605
        %v2150 = vpack.c.b16 %v1610, %v1606
        %v2151 = vpack.c.b16 %v1615, %v1611
        %v2152 = vpack.c.b16 %v1616, %v1612
        %v2153 = vpack.c.b16 %v1617, %v1613
        %v2154 = vpack.c.b16 %v1618, %v1614
        %v2155 = vpack.c.b16 %v1623, %v1619
        %v2156 = vpack.c.b16 %v1624, %v1620
        %v2157 = vpack.c.b16 %v1625, %v1621
        %v2158 = vpack.c.b16 %v1626, %v1622
        %v2159 = vpack.c.b16 %v1631, %v1627
        %v2160 = vpack.c.b16 %v1632, %v1628
        %v2161 = vpack.c.b16 %v1633, %v1629
        %v2162 = vpack.c.b16 %v1634, %v1630
        %v2163 = vpack.c.b16 %v1639, %v1635
        %v2164 = vpack.c.b16 %v1640, %v1636
        %v2165 = vpack.c.b16 %v1641, %v1637
        %v2166 = vpack.c.b16 %v1642, %v1638
        %v2167 = vpack.c.b16 %v1647, %v1643
        %v2168 = vpack.c.b16 %v1648, %v1644
        %v2169 = vpack.c.b16 %v1649, %v1645
        %v2170 = vpack.c.b16 %v1650, %v1646
        %v2171 = vpack.c.b16 %v1655, %v1651
        %v2172 = vpack.c.b16 %v1656, %v1652
        %v2173 = vpack.c.b16 %v1657, %v1653
        %v2174 = vpack.c.b16 %v1658, %v1654
        %v2175 = vpack.c.b16 %v1663, %v1659
        %v2176 = vpack.c.b16 %v1664, %v1660
        %v2177 = vpack.c.b16 %v1665, %v1661
        %v2178 = vpack.c.b16 %v1666, %v1662
        %v2179 = vpack.c.b16 %v1671, %v1667
        %v2180 = vpack.c.b16 %v1672, %v1668
        %v2181 = vpack.c.b16 %v1673, %v1669
        %v2182 = vpack.c.b16 %v1674, %v1670
        %v2183 = vpack.c.b16 %v1679, %v1675
        %v2184 = vpack.c.b16 %v1680, %v1676
        %v2185 = vpack.c.b16 %v1681, %v1677
        %v2186 = vpack.c.b16 %v1682, %v1678
        %v2187 = vpack.c.b16 %v1687, %v1683
        %v2188 = vpack.c.b16 %v1688, %v1684
        %v2189 = vpack.c.b16 %v1689, %v1685
        %v2190 = vpack.c.b16 %v1690, %v1686
        %v2191 = vpack.c.b16 %v1695, %v1691
        %v2192 = vpack.c.b16 %v1696, %v1692
        %v2193 = vpack.c.b16 %v1697, %v1693
        %v2194 = vpack.c.b16 %v1698, %v1694
        %v2195 = vpack.c.b16 %v1703, %v1699
        %v2196 = vpack.c.b16 %v1704, %v1700
        %v2197 = vpack.c.b16 %v1705, %v1701
        %v2198 = vpack.c.b16 %v1706, %v1702
        %v2199 = vpack.c.b16 %v1711, %v1707
        %v2200 = vpack.c.b16 %v1712, %v1708
        %v2201 = vpack.c.b16 %v1713, %v1709
        %v2202 = vpack.c.b16 %v1714, %v1710
        %v2203 = vpack.c.b16 %v1719, %v1715
        %v2204 = vpack.c.b16 %v1720, %v1716
        %v2205 = vpack.c.b16 %v1721, %v1717
        %v2206 = vpack.c.b16 %v1722, %v1718
        %v2207 = vpack.c.b16 %v1727, %v1723
        %v2208 = vpack.c.b16 %v1728, %v1724
        %v2209 = vpack.c.b16 %v1729, %v1725
        %v2210 = vpack.c.b16 %v1730, %v1726
        %v2211 = vpack.c.b16 %v1735, %v1731
        %v2212 = vpack.c.b16 %v1736, %v1732
        %v2213 = vpack.c.b16 %v1737, %v1733
        %v2214 = vpack.c.b16 %v1738, %v1734
        %v2215 = vpack.c.b16 %v1743, %v1739
        %v2216 = vpack.c.b16 %v1744, %v1740
        %v2217 = vpack.c.b16 %v1745, %v1741
        %v2218 = vpack.c.b16 %v1746, %v1742
        %v2219 = vpack.c.b16 %v1751, %v1747
        %v2220 = vpack.c.b16 %v1752, %v1748
        %v2221 = vpack.c.b16 %v1753, %v1749
        %v2222 = vpack.c.b16 %v1754, %v1750
        %v2223 = vpack.c.b16 %v1759, %v1755
        %v2224 = vpack.c.b16 %v1760, %v1756
        %v2225 = vpack.c.b16 %v1761, %v1757
        %v2226 = vpack.c.b16 %v1762, %v1758
        %v2227 = vpack.c.b16 %v1767, %v1763
        %v2228 = vpack.c.b16 %v1768, %v1764
        %v2229 = vpack.c.b16 %v1769, %v1765
        %v2230 = vpack.c.b16 %v1770, %v1766
        %v2231 = vpack.c.b16 %v1775, %v1771
        %v2232 = vpack.c.b16 %v1776, %v1772
        %v2233 = vpack.c.b16 %v1777, %v1773
        %v2234 = vpack.c.b16 %v1778, %v1774
        %v2235 = vpack.c.b16 %v1783, %v1779
        %v2236 = vpack.c.b16 %v1784, %v1780
        %v2237 = vpack.c.b16 %v1785, %v1781
        %v2238 = vpack.c.b16 %v1786, %v1782
        %v2239 = vpack.c.b16 %v1791, %v1787
        %v2240 = vpack.c.b16 %v1792, %v1788
        %v2241 = vpack.c.b16 %v1793, %v1789
        %v2242 = vpack.c.b16 %v1794, %v1790
        %v2243 = vpack.c.b16 %v1799, %v1795
        %v2244 = vpack.c.b16 %v1800, %v1796
        %v2245 = vpack.c.b16 %v1801, %v1797
        %v2246 = vpack.c.b16 %v1802, %v1798
        %v2247 = vpack.c.b16 %v1807, %v1803
        %v2248 = vpack.c.b16 %v1808, %v1804
        %v2249 = vpack.c.b16 %v1809, %v1805
        %v2250 = vpack.c.b16 %v1810, %v1806
        %v2251 = vpack.c.b16 %v1815, %v1811
        %v2252 = vpack.c.b16 %v1816, %v1812
        %v2253 = vpack.c.b16 %v1817, %v1813
        %v2254 = vpack.c.b16 %v1818, %v1814
        %v2255 = vpack.c.b16 %v1823, %v1819
        %v2256 = vpack.c.b16 %v1824, %v1820
        %v2257 = vpack.c.b16 %v1825, %v1821
        %v2258 = vpack.c.b16 %v1826, %v1822
        %v2259 = vpack.c.b16 %v1831, %v1827
        %v2260 = vpack.c.b16 %v1832, %v1828
        %v2261 = vpack.c.b16 %v1833, %v1829
        %v2262 = vpack.c.b16 %v1834, %v1830
        %v2263 = vpack.c.b16 %v1839, %v1835
        %v2264 = vpack.c.b16 %v1840, %v1836
        %v2265 = vpack.c.b16 %v1841, %v1837
        %v2266 = vpack.c.b16 %v1842, %v1838
        %v2267 = vpack.c.b16 %v1847, %v1843
        %v2268 = vpack.c.b16 %v1848, %v1844
        %v2269 = vpack.c.b16 %v1849, %v1845
        %v2270 = vpack.c.b16 %v1850, %v1846
        %v2271 = vpack.c.b16 %v1855, %v1851
        %v2272 = vpack.c.b16 %v1856, %v1852
        %v2273 = vpack.c.b16 %v1857, %v1853
        %v2274 = vpack.c.b16 %v1858, %v1854
        %v2275 = vpack.c.b16 %v1863, %v1859
        %v2276 = vpack.c.b16 %v1864, %v1860
        %v2277 = vpack.c.b16 %v1865, %v1861
        %v2278 = vpack.c.b16 %v1866, %v1862
        %v2279 = vpack.c.b16 %v1871, %v1867
        %v2280 = vpack.c.b16 %v1872, %v1868
        %v2281 = vpack.c.b16 %v1873, %v1869
        %v2282 = vpack.c.b16 %v1874, %v1870
        %v2283 = vpack.c.b16 %v1879, %v1875
        %v2284 = vpack.c.b16 %v1880, %v1876
        %v2285 = vpack.c.b16 %v1881, %v1877
        %v2286 = vpack.c.b16 %v1882, %v1878
        %v2287 = vpack.c.b16 %v1887, %v1883
        %v2288 = vpack.c.b16 %v1888, %v1884
        %v2289 = vpack.c.b16 %v1889, %v1885
        %v2290 = vpack.c.b16 %v1890, %v1886
        %v2291 = vpack.c.b16 %v1895, %v1891
        %v2292 = vpack.c.b16 %v1896, %v1892
        %v2293 = vpack.c.b16 %v1897, %v1893
        %v2294 = vpack.c.b16 %v1898, %v1894
        %v2295 = vpack.c.b16 %v1903, %v1899
        %v2296 = vpack.c.b16 %v1904, %v1900
        %v2297 = vpack.c.b16 %v1905, %v1901
        %v2298 = vpack.c.b16 %v1906, %v1902
        %v2299 = vpack.c.b16 %v1911, %v1907
        %v2300 = vpack.c.b16 %v1912, %v1908
        %v2301 = vpack.c.b16 %v1913, %v1909
        %v2302 = vpack.c.b16 %v1914, %v1910
        %v2303 = vpack.c.b16 %v1919, %v1915
        %v2304 = vpack.c.b16 %v1920, %v1916
        %v2305 = vpack.c.b16 %v1921, %v1917
        %v2306 = vpack.c.b16 %v1922, %v1918
        %v2307 = vpack.c.b16 %v1927, %v1923
        %v2308 = vpack.c.b16 %v1928, %v1924
        %v2309 = vpack.c.b16 %v1929, %v1925
        %v2310 = vpack.c.b16 %v1930, %v1926
        %v2311 = vpack.c.b16 %v1935, %v1931
        %v2312 = vpack.c.b16 %v1936, %v1932
        %v2313 = vpack.c.b16 %v1937, %v1933
        %v2314 = vpack.c.b16 %v1938, %v1934
        %v2315 = vpack.c.b16 %v1943, %v1939
        %v2316 = vpack.c.b16 %v1944, %v1940
        %v2317 = vpack.c.b16 %v1945, %v1941
        %v2318 = vpack.c.b16 %v1946, %v1942
        %v2319 = vpack.c.b16 %v1951, %v1947
        %v2320 = vpack.c.b16 %v1952, %v1948
        %v2321 = vpack.c.b16 %v1953, %v1949
        %v2322 = vpack.c.b16 %v1954, %v1950
        %v2323 = vpack.c.b16 %v1959, %v1955
        %v2324 = vpack.c.b16 %v1960, %v1956
        %v2325 = vpack.c.b16 %v1961, %v1957
        %v2326 = vpack.c.b16 %v1962, %v1958
        %v2327 = vpack.c.b16 %v1967, %v1963
        %v2328 = vpack.c.b16 %v1968, %v1964
        %v2329 = vpack.c.b16 %v1969, %v1965
        %v2330 = vpack.c.b16 %v1970, %v1966
        %v2331 = vpack.c.b16 %v1975, %v1971
        %v2332 = vpack.c.b16 %v1976, %v1972
        %v2333 = vpack.c.b16 %v1977, %v1973
        %v2334 = vpack.c.b16 %v1978, %v1974
        %v2335 = vpack.c.b16 %v1983, %v1979
        %v2336 = vpack.c.b16 %v1984, %v1980
        %v2337 = vpack.c.b16 %v1985, %v1981
        %v2338 = vpack.c.b16 %v1986, %v1982
        %v2339 = vpack.c.b16 %v1991, %v1987
        %v2340 = vpack.c.b16 %v1992, %v1988
        %v2341 = vpack.c.b16 %v1993, %v1989
        %v2342 = vpack.c.b16 %v1994, %v1990
        %v2343 = vpack.c.b16 %v1999, %v1995
        %v2344 = vpack.c.b16 %v2000, %v1996
        %v2345 = vpack.c.b16 %v2001, %v1997
        %v2346 = vpack.c.b16 %v2002, %v1998
        %v2347 = vpack.c.b16 %v2007, %v2003
        %v2348 = vpack.c.b16 %v2008, %v2004
        %v2349 = vpack.c.b16 %v2009, %v2005
        %v2350 = vpack.c.b16 %v2010, %v2006
        %v2351 = vpack.c.b16 %v2015, %v2011
        %v2352 = vpack.c.b16 %v2016, %v2012
        %v2353 = vpack.c.b16 %v2017, %v2013
        %v2354 = vpack.c.b16 %v2018, %v2014
        %v2355 = vpack.c.b16 %v2023, %v2019
        %v2356 = vpack.c.b16 %v2024, %v2020
        %v2357 = vpack.c.b16 %v2025, %v2021
        %v2358 = vpack.c.b16 %v2026, %v2022
        %v2359 = vpack.c.b16 %v2031, %v2027
        %v2360 = vpack.c.b16 %v2032, %v2028
        %v2361 = vpack.c.b16 %v2033, %v2029
        %v2362 = vpack.c.b16 %v2034, %v2030
        %v2363 = vpack.c.b16 %v2039, %v2035
        %v2364 = vpack.c.b16 %v2040, %v2036
        %v2365 = vpack.c.b16 %v2041, %v2037
        %v2366 = vpack.c.b16 %v2042, %v2038
        %v2367 = vpack.c.b16 %v2047, %v2043
        %v2368 = vpack.c.b16 %v2048, %v2044
        %v2369 = vpack.c.b16 %v2049, %v2045
        %v2370 = vpack.c.b16 %v2050, %v2046
        %2691 = vmatprep.subr.bf16.mxu0 %v2052
        %2692 = vmatpush1.bf16.msra.mxu0 %v2051
        %2693 = vmatprep.subr.bf16.mxu0 %v2056
        %2694 = vmatpush1.bf16.msra.mxu0 %v2055
        %2695 = vmatprep.subr.bf16.mxu0 %v2060
        %2696 = vmatpush1.bf16.msra.mxu0 %v2059
        %2697 = vmatprep.subr.bf16.mxu0 %v2064
        %2698 = vmatpush1.bf16.msra.mxu0 %v2063
        %2699 = vmatprep.subr.bf16.mxu0 %v2068
        %2700 = vmatpush1.bf16.msra.mxu0 %v2067
        %2701 = vmatprep.subr.bf16.mxu0 %v2072
        %2702 = vmatpush1.bf16.msra.mxu0 %v2071
        %2703 = vmatprep.subr.bf16.mxu0 %v2076
        %2704 = vmatpush1.bf16.msra.mxu0 %v2075
        %2705 = vmatprep.subr.bf16.mxu0 %v2080
        %2706 = vmatpush1.bf16.msra.mxu0 %v2079
        %2707 = vmatprep.subr.bf16.mxu0 %v2084
        %2708 = vmatpush1.bf16.msra.mxu0 %v2083
        %2709 = vmatprep.subr.bf16.mxu0 %v2088
        %2710 = vmatpush1.bf16.msra.mxu0 %v2087
        %2711 = vmatprep.subr.bf16.mxu0 %v2092
        %2712 = vmatpush1.bf16.msra.mxu0 %v2091
        %2713 = vmatprep.subr.bf16.mxu0 %v2096
        %2714 = vmatpush1.bf16.msra.mxu0 %v2095
        %2715 = vmatprep.subr.bf16.mxu0 %v2100
        %2716 = vmatpush1.bf16.msra.mxu0 %v2099
        %2717 = vmatprep.subr.bf16.mxu0 %v2104
        %2718 = vmatpush1.bf16.msra.mxu0 %v2103
        %2719 = vmatprep.subr.bf16.mxu0 %v2108
        %2720 = vmatpush1.bf16.msra.mxu0 %v2107
        %2721 = vmatprep.subr.bf16.mxu0 %v2112
        %2722 = vmatpush1.bf16.msra.mxu0 %v2111
        %2723 = vmatprep.mubr.bf16.mxu0 %v714
        %2724 = vmatmul.mubr.bf16.gmra.mrb[0].mxu0 %v713
        %v2725 = vpop.f32.mrb[0].mxu0
        %v2726 = vadd.f32 %v1074, %v2725
        %v2727 = vpop.f32.mrb[0].mxu0
        %v2728 = vadd.f32 %v1078, %v2727
        %v2729 = vpop.f32.mrb[0].mxu0
        %v2730 = vpop.f32.mrb[0].mxu0
        %2731 = vdwg.mxu0
        %2732 = vmatprep.subr.bf16.mxu0 %v2116
        %2733 = vmatpush1.bf16.msra.mxu0 %v2115
        %2734 = vmatprep.subr.bf16.mxu0 %v2120
        %2735 = vmatpush1.bf16.msra.mxu0 %v2119
        %2736 = vmatprep.subr.bf16.mxu0 %v2124
        %2737 = vmatpush1.bf16.msra.mxu0 %v2123
        %2738 = vmatprep.subr.bf16.mxu0 %v2128
        %2739 = vmatpush1.bf16.msra.mxu0 %v2127
        %2740 = vmatprep.subr.bf16.mxu0 %v2132
        %2741 = vmatpush1.bf16.msra.mxu0 %v2131
        %2742 = vmatprep.subr.bf16.mxu0 %v2136
        %2743 = vmatpush1.bf16.msra.mxu0 %v2135
        %2744 = vmatprep.subr.bf16.mxu0 %v2140
        %2745 = vmatpush1.bf16.msra.mxu0 %v2139
        %2746 = vmatprep.subr.bf16.mxu0 %v2144
        %2747 = vmatpush1.bf16.msra.mxu0 %v2143
        %2748 = vmatprep.subr.bf16.mxu0 %v2148
        %2749 = vmatpush1.bf16.msra.mxu0 %v2147
        %2750 = vmatprep.subr.bf16.mxu0 %v2152
        %2751 = vmatpush1.bf16.msra.mxu0 %v2151
        %2752 = vmatprep.subr.bf16.mxu0 %v2156
        %2753 = vmatpush1.bf16.msra.mxu0 %v2155
        %2754 = vmatprep.subr.bf16.mxu0 %v2160
        %2755 = vmatpush1.bf16.msra.mxu0 %v2159
        %2756 = vmatprep.subr.bf16.mxu0 %v2164
        %2757 = vmatpush1.bf16.msra.mxu0 %v2163
        %2758 = vmatprep.subr.bf16.mxu0 %v2168
        %2759 = vmatpush1.bf16.msra.mxu0 %v2167
        %2760 = vmatprep.subr.bf16.mxu0 %v2172
        %2761 = vmatpush1.bf16.msra.mxu0 %v2171
        %2762 = vmatprep.subr.bf16.mxu0 %v2176
        %2763 = vmatpush1.bf16.msra.mxu0 %v2175
        %2764 = vmatprep.mubr.bf16.mxu0 %v728
        %2765 = vmatmul.mubr.bf16.gmra.mrb[0].mxu0 %v721
        %v2766 = vpop.f32.mrb[0].mxu0
        %v2767 = vadd.f32 %v2726, %v2766
        %v2768 = vpop.f32.mrb[0].mxu0
        %v2769 = vadd.f32 %v2728, %v2768
        %v2770 = vpop.f32.mrb[0].mxu0
        %v2771 = vpop.f32.mrb[0].mxu0
        %2772 = vdwg.mxu0
        %2773 = vmatprep.subr.bf16.mxu0 %v2180
        %2774 = vmatpush1.bf16.msra.mxu0 %v2179
        %2775 = vmatprep.subr.bf16.mxu0 %v2184
        %2776 = vmatpush1.bf16.msra.mxu0 %v2183
        %2777 = vmatprep.subr.bf16.mxu0 %v2188
        %2778 = vmatpush1.bf16.msra.mxu0 %v2187
        %2779 = vmatprep.subr.bf16.mxu0 %v2192
        %2780 = vmatpush1.bf16.msra.mxu0 %v2191
        %2781 = vmatprep.subr.bf16.mxu0 %v2196
        %2782 = vmatpush1.bf16.msra.mxu0 %v2195
        %2783 = vmatprep.subr.bf16.mxu0 %v2200
        %2784 = vmatpush1.bf16.msra.mxu0 %v2199
        %2785 = vmatprep.subr.bf16.mxu0 %v2204
        %2786 = vmatpush1.bf16.msra.mxu0 %v2203
        %2787 = vmatprep.subr.bf16.mxu0 %v2208
        %2788 = vmatpush1.bf16.msra.mxu0 %v2207
        %2789 = vmatprep.subr.bf16.mxu0 %v2212
        %2790 = vmatpush1.bf16.msra.mxu0 %v2211
        %2791 = vmatprep.subr.bf16.mxu0 %v2216
        %2792 = vmatpush1.bf16.msra.mxu0 %v2215
        %2793 = vmatprep.subr.bf16.mxu0 %v2220
        %2794 = vmatpush1.bf16.msra.mxu0 %v2219
        %2795 = vmatprep.subr.bf16.mxu0 %v2224
        %2796 = vmatpush1.bf16.msra.mxu0 %v2223
        %2797 = vmatprep.subr.bf16.mxu0 %v2228
        %2798 = vmatpush1.bf16.msra.mxu0 %v2227
        %2799 = vmatprep.subr.bf16.mxu0 %v2232
        %2800 = vmatpush1.bf16.msra.mxu0 %v2231
        %2801 = vmatprep.subr.bf16.mxu0 %v2236
        %2802 = vmatpush1.bf16.msra.mxu0 %v2235
        %2803 = vmatprep.subr.bf16.mxu0 %v2240
        %2804 = vmatpush1.bf16.msra.mxu0 %v2239
        %2805 = vmatprep.mubr.bf16.mxu0 %v734
        %2806 = vmatmul.mubr.bf16.gmra.mrb[0].mxu0 %v733
        %v2807 = vpop.f32.mrb[0].mxu0
        %v2808 = vadd.f32 %v2767, %v2807
        %v2809 = vpop.f32.mrb[0].mxu0
        %v2810 = vadd.f32 %v2769, %v2809
        %v2811 = vpop.f32.mrb[0].mxu0
        %v2812 = vpop.f32.mrb[0].mxu0
        %2813 = vdwg.mxu0
        %2814 = vmatprep.subr.bf16.mxu0 %v2244
        %2815 = vmatpush1.bf16.msra.mxu0 %v2243
        %2816 = vmatprep.subr.bf16.mxu0 %v2248
        %2817 = vmatpush1.bf16.msra.mxu0 %v2247
        %2818 = vmatprep.subr.bf16.mxu0 %v2252
        %2819 = vmatpush1.bf16.msra.mxu0 %v2251
        %2820 = vmatprep.subr.bf16.mxu0 %v2256
        %2821 = vmatpush1.bf16.msra.mxu0 %v2255
        %2822 = vmatprep.subr.bf16.mxu0 %v2260
        %2823 = vmatpush1.bf16.msra.mxu0 %v2259
        %2824 = vmatprep.subr.bf16.mxu0 %v2264
        %2825 = vmatpush1.bf16.msra.mxu0 %v2263
        %2826 = vmatprep.subr.bf16.mxu0 %v2268
        %2827 = vmatpush1.bf16.msra.mxu0 %v2267
        %2828 = vmatprep.subr.bf16.mxu0 %v2272
        %2829 = vmatpush1.bf16.msra.mxu0 %v2271
        %2830 = vmatprep.subr.bf16.mxu0 %v2276
        %2831 = vmatpush1.bf16.msra.mxu0 %v2275
        %2832 = vmatprep.subr.bf16.mxu0 %v2280
        %2833 = vmatpush1.bf16.msra.mxu0 %v2279
        %2834 = vmatprep.subr.bf16.mxu0 %v2284
        %2835 = vmatpush1.bf16.msra.mxu0 %v2283
        %2836 = vmatprep.subr.bf16.mxu0 %v2288
        %2837 = vmatpush1.bf16.msra.mxu0 %v2287
        %2838 = vmatprep.subr.bf16.mxu0 %v2292
        %2839 = vmatpush1.bf16.msra.mxu0 %v2291
        %2840 = vmatprep.subr.bf16.mxu0 %v2296
        %2841 = vmatpush1.bf16.msra.mxu0 %v2295
        %2842 = vmatprep.subr.bf16.mxu0 %v2300
        %2843 = vmatpush1.bf16.msra.mxu0 %v2299
        %2844 = vmatprep.subr.bf16.mxu0 %v2304
        %2845 = vmatpush1.bf16.msra.mxu0 %v2303
        %2846 = vmatprep.mubr.bf16.mxu0 %v742
        %2847 = vmatmul.mubr.bf16.gmra.mrb[0].mxu0 %v739
        %v2848 = vpop.f32.mrb[0].mxu0
        %v2849 = vadd.f32 %v2808, %v2848
        %v2850 = vpop.f32.mrb[0].mxu0
        %v2851 = vadd.f32 %v2810, %v2850
        %v2852 = vpop.f32.mrb[0].mxu0
        %v2853 = vpop.f32.mrb[0].mxu0
        %2854 = vdwg.mxu0
        %2855 = vmatprep.subr.bf16.mxu0 %v2308
        %2856 = vmatpush1.bf16.msra.mxu0 %v2307
        %2857 = vmatprep.subr.bf16.mxu0 %v2312
        %2858 = vmatpush1.bf16.msra.mxu0 %v2311
        %2859 = vmatprep.subr.bf16.mxu0 %v2316
        %2860 = vmatpush1.bf16.msra.mxu0 %v2315
        %2861 = vmatprep.subr.bf16.mxu0 %v2320
        %2862 = vmatpush1.bf16.msra.mxu0 %v2319
        %2863 = vmatprep.subr.bf16.mxu0 %v2324
        %2864 = vmatpush1.bf16.msra.mxu0 %v2323
        %2865 = vmatprep.subr.bf16.mxu0 %v2328
        %2866 = vmatpush1.bf16.msra.mxu0 %v2327
        %2867 = vmatprep.subr.bf16.mxu0 %v2332
        %2868 = vmatpush1.bf16.msra.mxu0 %v2331
        %2869 = vmatprep.subr.bf16.mxu0 %v2336
        %2870 = vmatpush1.bf16.msra.mxu0 %v2335
        %2871 = vmatprep.subr.bf16.mxu0 %v2340
        %2872 = vmatpush1.bf16.msra.mxu0 %v2339
        %2873 = vmatprep.subr.bf16.mxu0 %v2344
        %2874 = vmatpush1.bf16.msra.mxu0 %v2343
        %2875 = vmatprep.subr.bf16.mxu0 %v2348
        %2876 = vmatpush1.bf16.msra.mxu0 %v2347
        %2877 = vmatprep.subr.bf16.mxu0 %v2352
        %2878 = vmatpush1.bf16.msra.mxu0 %v2351
        %2879 = vmatprep.subr.bf16.mxu0 %v2356
        %2880 = vmatpush1.bf16.msra.mxu0 %v2355
        %2881 = vmatprep.subr.bf16.mxu0 %v2360
        %2882 = vmatpush1.bf16.msra.mxu0 %v2359
        %2883 = vmatprep.subr.bf16.mxu0 %v2364
        %2884 = vmatpush1.bf16.msra.mxu0 %v2363
        %2885 = vmatprep.subr.bf16.mxu0 %v2368
        %2886 = vmatpush1.bf16.msra.mxu0 %v2367
        %2887 = vmatprep.mubr.bf16.mxu0 %v746
        %2888 = vmatmul.mubr.bf16.gmra.mrb[0].mxu0 %v745
        %v2889 = vpop.f32.mrb[0].mxu0
        %v2890 = vadd.f32 %v2849, %v2889
        %v2891 = vpop.f32.mrb[0].mxu0
        %v2892 = vadd.f32 %v2851, %v2891
        %v2893 = vpop.f32.mrb[0].mxu0
        %v2894 = vpop.f32.mrb[0].mxu0
        %2895 = vdwg.mxu0
        %2896 = vmatprep.subr.bf16.mxu0 %v2054
        %2897 = vmatpush1.bf16.msra.mxu0 %v2053
        %2898 = vmatprep.subr.bf16.mxu0 %v2058
        %2899 = vmatpush1.bf16.msra.mxu0 %v2057
        %2900 = vmatprep.subr.bf16.mxu0 %v2062
        %2901 = vmatpush1.bf16.msra.mxu0 %v2061
        %2902 = vmatprep.subr.bf16.mxu0 %v2066
        %2903 = vmatpush1.bf16.msra.mxu0 %v2065
        %2904 = vmatprep.subr.bf16.mxu0 %v2070
        %2905 = vmatpush1.bf16.msra.mxu0 %v2069
        %2906 = vmatprep.subr.bf16.mxu0 %v2074
        %2907 = vmatpush1.bf16.msra.mxu0 %v2073
        %2908 = vmatprep.subr.bf16.mxu0 %v2078
        %2909 = vmatpush1.bf16.msra.mxu0 %v2077
        %2910 = vmatprep.subr.bf16.mxu0 %v2082
        %2911 = vmatpush1.bf16.msra.mxu0 %v2081
        %2912 = vmatprep.subr.bf16.mxu0 %v2086
        %2913 = vmatpush1.bf16.msra.mxu0 %v2085
        %2914 = vmatprep.subr.bf16.mxu0 %v2090
        %2915 = vmatpush1.bf16.msra.mxu0 %v2089
        %2916 = vmatprep.subr.bf16.mxu0 %v2094
        %2917 = vmatpush1.bf16.msra.mxu0 %v2093
        %2918 = vmatprep.subr.bf16.mxu0 %v2098
        %2919 = vmatpush1.bf16.msra.mxu0 %v2097
        %2920 = vmatprep.subr.bf16.mxu0 %v2102
        %2921 = vmatpush1.bf16.msra.mxu0 %v2101
        %2922 = vmatprep.subr.bf16.mxu0 %v2106
        %2923 = vmatpush1.bf16.msra.mxu0 %v2105
        %2924 = vmatprep.subr.bf16.mxu0 %v2110
        %2925 = vmatpush1.bf16.msra.mxu0 %v2109
        %2926 = vmatprep.subr.bf16.mxu0 %v2114
        %2927 = vmatpush1.bf16.msra.mxu0 %v2113
        %2928 = vmatprep.mubr.bf16.mxu0 %v714
        %2929 = vmatmul.mubr.bf16.gmra.mrb[0].mxu0 %v713
        %v2930 = vpop.f32.mrb[0].mxu0
        %v2931 = vadd.f32 %v1082, %v2930
        %v2932 = vpop.f32.mrb[0].mxu0
        %v2933 = vadd.f32 %v1086, %v2932
        %v2934 = vpop.f32.mrb[0].mxu0
        %v2935 = vpop.f32.mrb[0].mxu0
        %2936 = vdwg.mxu0
        %2937 = vmatprep.subr.bf16.mxu0 %v2118
        %2938 = vmatpush1.bf16.msra.mxu0 %v2117
        %2939 = vmatprep.subr.bf16.mxu0 %v2122
        %2940 = vmatpush1.bf16.msra.mxu0 %v2121
        %2941 = vmatprep.subr.bf16.mxu0 %v2126
        %2942 = vmatpush1.bf16.msra.mxu0 %v2125
        %2943 = vmatprep.subr.bf16.mxu0 %v2130
        %2944 = vmatpush1.bf16.msra.mxu0 %v2129
        %2945 = vmatprep.subr.bf16.mxu0 %v2134
        %2946 = vmatpush1.bf16.msra.mxu0 %v2133
        %2947 = vmatprep.subr.bf16.mxu0 %v2138
        %2948 = vmatpush1.bf16.msra.mxu0 %v2137
        %2949 = vmatprep.subr.bf16.mxu0 %v2142
        %2950 = vmatpush1.bf16.msra.mxu0 %v2141
        %2951 = vmatprep.subr.bf16.mxu0 %v2146
        %2952 = vmatpush1.bf16.msra.mxu0 %v2145
        %2953 = vmatprep.subr.bf16.mxu0 %v2150
        %2954 = vmatpush1.bf16.msra.mxu0 %v2149
        %2955 = vmatprep.subr.bf16.mxu0 %v2154
        %2956 = vmatpush1.bf16.msra.mxu0 %v2153
        %2957 = vmatprep.subr.bf16.mxu0 %v2158
        %2958 = vmatpush1.bf16.msra.mxu0 %v2157
        %2959 = vmatprep.subr.bf16.mxu0 %v2162
        %2960 = vmatpush1.bf16.msra.mxu0 %v2161
        %2961 = vmatprep.subr.bf16.mxu0 %v2166
        %2962 = vmatpush1.bf16.msra.mxu0 %v2165
        %2963 = vmatprep.subr.bf16.mxu0 %v2170
        %2964 = vmatpush1.bf16.msra.mxu0 %v2169
        %2965 = vmatprep.subr.bf16.mxu0 %v2174
        %2966 = vmatpush1.bf16.msra.mxu0 %v2173
        %2967 = vmatprep.subr.bf16.mxu0 %v2178
        %2968 = vmatpush1.bf16.msra.mxu0 %v2177
        %2969 = vmatprep.mubr.bf16.mxu0 %v728
        %2970 = vmatmul.mubr.bf16.gmra.mrb[0].mxu0 %v721
        %v2971 = vpop.f32.mrb[0].mxu0
        %v2972 = vadd.f32 %v2931, %v2971
        %v2973 = vpop.f32.mrb[0].mxu0
        %v2974 = vadd.f32 %v2933, %v2973
        %v2975 = vpop.f32.mrb[0].mxu0
        %v2976 = vpop.f32.mrb[0].mxu0
        %2977 = vdwg.mxu0
        %2978 = vmatprep.subr.bf16.mxu0 %v2182
        %2979 = vmatpush1.bf16.msra.mxu0 %v2181
        %2980 = vmatprep.subr.bf16.mxu0 %v2186
        %2981 = vmatpush1.bf16.msra.mxu0 %v2185
        %2982 = vmatprep.subr.bf16.mxu0 %v2190
        %2983 = vmatpush1.bf16.msra.mxu0 %v2189
        %2984 = vmatprep.subr.bf16.mxu0 %v2194
        %2985 = vmatpush1.bf16.msra.mxu0 %v2193
        %2986 = vmatprep.subr.bf16.mxu0 %v2198
        %2987 = vmatpush1.bf16.msra.mxu0 %v2197
        %2988 = vmatprep.subr.bf16.mxu0 %v2202
        %2989 = vmatpush1.bf16.msra.mxu0 %v2201
        %2990 = vmatprep.subr.bf16.mxu0 %v2206
        %2991 = vmatpush1.bf16.msra.mxu0 %v2205
        %2992 = vmatprep.subr.bf16.mxu0 %v2210
        %2993 = vmatpush1.bf16.msra.mxu0 %v2209
        %2994 = vmatprep.subr.bf16.mxu0 %v2214
        %2995 = vmatpush1.bf16.msra.mxu0 %v2213
        %2996 = vmatprep.subr.bf16.mxu0 %v2218
        %2997 = vmatpush1.bf16.msra.mxu0 %v2217
        %2998 = vmatprep.subr.bf16.mxu0 %v2222
        %2999 = vmatpush1.bf16.msra.mxu0 %v2221
        %3000 = vmatprep.subr.bf16.mxu0 %v2226
        %3001 = vmatpush1.bf16.msra.mxu0 %v2225
        %3002 = vmatprep.subr.bf16.mxu0 %v2230
        %3003 = vmatpush1.bf16.msra.mxu0 %v2229
        %3004 = vmatprep.subr.bf16.mxu0 %v2234
        %3005 = vmatpush1.bf16.msra.mxu0 %v2233
        %3006 = vmatprep.subr.bf16.mxu0 %v2238
        %3007 = vmatpush1.bf16.msra.mxu0 %v2237
        %3008 = vmatprep.subr.bf16.mxu0 %v2242
        %3009 = vmatpush1.bf16.msra.mxu0 %v2241
        %3010 = vmatprep.mubr.bf16.mxu0 %v734
        %3011 = vmatmul.mubr.bf16.gmra.mrb[0].mxu0 %v733
        %v3012 = vpop.f32.mrb[0].mxu0
        %v3013 = vadd.f32 %v2972, %v3012
        %v3014 = vpop.f32.mrb[0].mxu0
        %v3015 = vadd.f32 %v2974, %v3014
        %v3016 = vpop.f32.mrb[0].mxu0
        %v3017 = vpop.f32.mrb[0].mxu0
        %3018 = vdwg.mxu0
        %3019 = vmatprep.subr.bf16.mxu0 %v2246
        %3020 = vmatpush1.bf16.msra.mxu0 %v2245
        %3021 = vmatprep.subr.bf16.mxu0 %v2250
        %3022 = vmatpush1.bf16.msra.mxu0 %v2249
        %3023 = vmatprep.subr.bf16.mxu0 %v2254
        %3024 = vmatpush1.bf16.msra.mxu0 %v2253
        %3025 = vmatprep.subr.bf16.mxu0 %v2258
        %3026 = vmatpush1.bf16.msra.mxu0 %v2257
        %3027 = vmatprep.subr.bf16.mxu0 %v2262
        %3028 = vmatpush1.bf16.msra.mxu0 %v2261
        %3029 = vmatprep.subr.bf16.mxu0 %v2266
        %3030 = vmatpush1.bf16.msra.mxu0 %v2265
        %3031 = vmatprep.subr.bf16.mxu0 %v2270
        %3032 = vmatpush1.bf16.msra.mxu0 %v2269
        %3033 = vmatprep.subr.bf16.mxu0 %v2274
        %3034 = vmatpush1.bf16.msra.mxu0 %v2273
        %3035 = vmatprep.subr.bf16.mxu0 %v2278
        %3036 = vmatpush1.bf16.msra.mxu0 %v2277
        %3037 = vmatprep.subr.bf16.mxu0 %v2282
        %3038 = vmatpush1.bf16.msra.mxu0 %v2281
        %3039 = vmatprep.subr.bf16.mxu0 %v2286
        %3040 = vmatpush1.bf16.msra.mxu0 %v2285
        %3041 = vmatprep.subr.bf16.mxu0 %v2290
        %3042 = vmatpush1.bf16.msra.mxu0 %v2289
        %3043 = vmatprep.subr.bf16.mxu0 %v2294
        %3044 = vmatpush1.bf16.msra.mxu0 %v2293
        %3045 = vmatprep.subr.bf16.mxu0 %v2298
        %3046 = vmatpush1.bf16.msra.mxu0 %v2297
        %3047 = vmatprep.subr.bf16.mxu0 %v2302
        %3048 = vmatpush1.bf16.msra.mxu0 %v2301
        %3049 = vmatprep.subr.bf16.mxu0 %v2306
        %3050 = vmatpush1.bf16.msra.mxu0 %v2305
        %3051 = vmatprep.mubr.bf16.mxu0 %v742
        %3052 = vmatmul.mubr.bf16.gmra.mrb[0].mxu0 %v739
        %v3053 = vpop.f32.mrb[0].mxu0
        %v3054 = vadd.f32 %v3013, %v3053
        %v3055 = vpop.f32.mrb[0].mxu0
        %v3056 = vadd.f32 %v3015, %v3055
        %v3057 = vpop.f32.mrb[0].mxu0
        %v3058 = vpop.f32.mrb[0].mxu0
        %3059 = vdwg.mxu0
        %3060 = vmatprep.subr.bf16.mxu0 %v2310
        %3061 = vmatpush1.bf16.msra.mxu0 %v2309
        %3062 = vmatprep.subr.bf16.mxu0 %v2314
        %3063 = vmatpush1.bf16.msra.mxu0 %v2313
        %3064 = vmatprep.subr.bf16.mxu0 %v2318
        %3065 = vmatpush1.bf16.msra.mxu0 %v2317
        %3066 = vmatprep.subr.bf16.mxu0 %v2322
        %3067 = vmatpush1.bf16.msra.mxu0 %v2321
        %3068 = vmatprep.subr.bf16.mxu0 %v2326
        %3069 = vmatpush1.bf16.msra.mxu0 %v2325
        %3070 = vmatprep.subr.bf16.mxu0 %v2330
        %3071 = vmatpush1.bf16.msra.mxu0 %v2329
        %3072 = vmatprep.subr.bf16.mxu0 %v2334
        %3073 = vmatpush1.bf16.msra.mxu0 %v2333
        %3074 = vmatprep.subr.bf16.mxu0 %v2338
        %3075 = vmatpush1.bf16.msra.mxu0 %v2337
        %3076 = vmatprep.subr.bf16.mxu0 %v2342
        %3077 = vmatpush1.bf16.msra.mxu0 %v2341
        %3078 = vmatprep.subr.bf16.mxu0 %v2346
        %3079 = vmatpush1.bf16.msra.mxu0 %v2345
        %3080 = vmatprep.subr.bf16.mxu0 %v2350
        %3081 = vmatpush1.bf16.msra.mxu0 %v2349
        %3082 = vmatprep.subr.bf16.mxu0 %v2354
        %3083 = vmatpush1.bf16.msra.mxu0 %v2353
        %3084 = vmatprep.subr.bf16.mxu0 %v2358
        %3085 = vmatpush1.bf16.msra.mxu0 %v2357
        %3086 = vmatprep.subr.bf16.mxu0 %v2362
        %3087 = vmatpush1.bf16.msra.mxu0 %v2361
        %3088 = vmatprep.subr.bf16.mxu0 %v2366
        %3089 = vmatpush1.bf16.msra.mxu0 %v2365
        %3090 = vmatprep.subr.bf16.mxu0 %v2370
        %3091 = vmatpush1.bf16.msra.mxu0 %v2369
        %3092 = vmatprep.mubr.bf16.mxu0 %v746
        %3093 = vmatmul.mubr.bf16.gmra.mrb[0].mxu0 %v745
        %v3094 = vpop.f32.mrb[0].mxu0
        %v3095 = vadd.f32 %v3054, %v3094
        %v3096 = vpop.f32.mrb[0].mxu0
        %v3097 = vadd.f32 %v3056, %v3096
        %v3098 = vpop.f32.mrb[0].mxu0
        %v3099 = vpop.f32.mrb[0].mxu0
        %3100 = vdwg.mxu0
        %v3101 = vmax.f32 %v2890, 0.0
        %v3102 = vmax.f32 %v2892, 0.0
        %v3103 = vmax.f32 %v3095, 0.0
        %v3104 = vmax.f32 %v3097, 0.0
        %3105 = vst [vmem:[%s284] sm:$0xff] %v3101
        %3106 = vst [vmem:[%s284 + $0x8] sm:$0xff] %v3102
        %3107 = vst [vmem:[%s284 + $0x10] sm:$0xff] %v3103
        %3108 = vst [vmem:[%s284 + $0x18] sm:$0xff] %v3104
        %p3109 = scmp.lt.s32.totalorder %s19, 1
        %s3110 = scalar_select %p3109, %s19, 1
        %s3111 = smul.addr %s3110, 4
        %s3112 = smul.addr %s3111, 8
        %s3113 = scalar_lea.vmem %s5, %s3112
        // Predicated region
        $region57: #{mymodel_forward.1} parent=39 // pred_check
          %p3114 = pneg %p147
        $region58: #{mymodel_forward.1} parent=39 // pred_check_branch
          %3116 = sbr.rel (%p3114) target = $region60
        $region59: #{mymodel_forward.1} parent=39 // pred_region
          _
        $region60: #{mymodel_forward.1} parent=39 // pred_fallthru
          _
      $region40: #{mymodel_forward.1} parent=5 // pred_fallthru
        _
      %p3117 = scmp.le.s32.totalorder 2, %s14
      // Predicated region
      $region61: #{mymodel_forward.1} parent=5 // pred_check
        %p3118 = pneg %p3117
      $region62: #{mymodel_forward.1} parent=5 // pred_check_branch
        %3120 = sbr.rel (%p3118) target = $region64
      $region63: #{mymodel_forward.1} parent=5 // pred_region
        %s3121 = ssub.s32 %s14, 2
        // Predicated region
        $region65: #{mymodel_forward.1} parent=63 // pred_check
          %p3122 = pneg %p153
        $region66: #{mymodel_forward.1} parent=63 // pred_check_branch
          %3124 = sbr.rel (%p3122) target = $region68
        $region67: #{mymodel_forward.1} parent=63 // pred_region
          %p3125 = scmp.lt.s32.totalorder %s20, 1
          %s3126 = scalar_select %p3125, %s20, 1
          %s3127 = smul.addr %s3126, 4
          %s3128 = smul.addr %s3127, 8
          %s3129 = scalar_lea.vmem %s5, %s3128
        $region68: #{mymodel_forward.1} parent=63 // pred_fallthru
          _
      $region64: #{mymodel_forward.1} parent=5 // pred_fallthru
        _
    $region6: #{mymodel_forward.1} parent=1 // loop_footer
      %s18 = sadd.s32 1, %s14
    $region7: #{mymodel_forward.1} parent=1 // loop_footer_branch
      %13 = sbr.rel target = $region3
    $region8: #{mymodel_forward.1} parent=1 // loop_exit
      _
    %3130 = vsyncpa [#allocation3], 1
    %s3131 = scalar_lea.sflag [#allocation3], 1
    %3132 = vsyncpa %s3131, 1
    %3133 = vsyncpa [#allocation5], 1
    %3134 = vsyncpa [#allocation8], 1

</llo_original>
